<compile_context>
chip_gen: v7x
topology: tpu7x:2x2x1
jax: 0.10.0
libtpu: 0.0.40
codegen_flags: <defaults>
</compile_context>

<pallas_src>
import functools
import math

import jax
import jax.numpy as jnp
from jax.experimental import pallas as pl
from jax.experimental.pallas import tpu as pltpu


# ----------------------------------------------------------------------------
# tiling helpers
# ----------------------------------------------------------------------------
_VMEM_LIMIT = 48 * 1024 * 1024  # <= v7x's 64 MiB/TC; per-step use is ~<20 MiB


def _choose_tile(dim, cap, align):
    """Largest divisor of `dim` <= cap, preferring multiples of `align`
    (MXU-friendly 256), then 128, then 8.  Returns `dim` when it already fits
    under `cap`, and 0 when no aligned divisor exists (caller pads)."""
    if dim <= cap:
        return dim
    for a in (align, 128, 8):
        best = 0
        for t in range(a, cap + 1, a):
            if dim % t == 0:
                best = t
        if best:
            return best
    return 0


def _pad_rows(x, tile):
    pad = (-x.shape[0]) % tile
    if pad:
        x = jnp.pad(x, ((0, pad), (0, 0)))
    return x, pad


# ----------------------------------------------------------------------------
# Pallas kernels
# ----------------------------------------------------------------------------
def _apply_activation(y, activation):
    if activation is None:
        return y
    if activation == "tanh":
        return jnp.tanh(y)
    if activation == "gelu":
        # tanh-approx GELU in f32.
        # TODO(synk): HF BertIntermediate defaults to exact erf-GELU; the tanh
        # approximation introduces a tiny numeric drift vs the PyTorch ref.
        return 0.5 * y * (1.0 + jnp.tanh(
            math.sqrt(2.0 / math.pi) * (y + 0.044715 * y * y * y)))
    raise ValueError(activation)


def _linear_kernel(x_ref, w_ref, b_ref, o_ref, *, activation):
    """y = act(x @ w + b); full-K block, f32 accumulation in the MXU path."""
    y = jnp.dot(x_ref[...], w_ref[...], preferred_element_type=jnp.float32)
    y = y + b_ref[...]                        # (1, tn) f32 bias broadcast
    o_ref[...] = _apply_activation(y, activation).astype(o_ref.dtype)


def pallas_linear(x, w, b, activation=None, out_dtype=jnp.bfloat16):
    """y = act(x @ w + b); x:[M,K] bf16 acts, w:[K,N] bf16 weights, b:[N] f32."""
    M, K = x.shape
    K2, N = w.shape
    assert K == K2
    # TODO(synk): add a K-tiled accumulator path for very large K; every K in
    # this model (<= 3072) fits a single full-K block comfortably in VMEM.
    tm = _choose_tile(M, 512, 256)
    tn = _choose_tile(N, 512, 256)
    assert tn, "N must fit one block or have a 128-aligned divisor <= 512"

    x_in = x.astype(jnp.bfloat16)
    if tm == 0:
        tm = 256
        x_in, pad_m = _pad_rows(x_in, tm)
    else:
        pad_m = 0
    Mp = M + pad_m

    kern = functools.partial(_linear_kernel, activation=activation)
    out = pl.pallas_call(
        kern,
        out_shape=jax.ShapeDtypeStruct((Mp, N), out_dtype),
        grid=(Mp // tm, N // tn),
        in_specs=[
            pl.BlockSpec((tm, K), lambda i, j: (i, 0)),
            pl.BlockSpec((K, tn), lambda i, j: (0, j)),
            pl.BlockSpec((1, tn), lambda i, j: (0, j)),
        ],
        out_specs=pl.BlockSpec((tm, tn), lambda i, j: (i, j)),
        compiler_params=pltpu.CompilerParams(
            dimension_semantics=("parallel", "parallel"),
            vmem_limit_bytes=_VMEM_LIMIT),
    )(x_in, w, b.reshape(1, N).astype(jnp.float32))
    return out[:M] if pad_m else out


def _linear_res_ln_kernel(x_ref, w_ref, b_ref, r_ref, g_ref, be_ref, o_ref,
                          *, eps):
    """Fused y = LayerNorm((x @ w + b) + residual) * gamma + beta."""
    y = jnp.dot(x_ref[...], w_ref[...], preferred_element_type=jnp.float32)
    y = y + b_ref[...] + r_ref[...].astype(jnp.float32)
    mu = jnp.mean(y, axis=-1, keepdims=True)
    var = jnp.mean((y - mu) ** 2, axis=-1, keepdims=True)
    yn = (y - mu) * jax.lax.rsqrt(var + eps)
    o_ref[...] = (yn * g_ref[...] + be_ref[...]).astype(o_ref.dtype)


def pallas_linear_res_ln(x, w, b, residual, gamma, beta, eps=1e-12,
                         out_dtype=jnp.bfloat16):
    """x:[M,K], w:[K,H], residual:[M,H] -> LN(x@w+b+residual); tn == H."""
    M, K = x.shape
    K2, H = w.shape
    assert K == K2 and residual.shape == (M, H)
    tm = _choose_tile(M, 512, 256)

    x_in = x.astype(jnp.bfloat16)
    r_in = residual.astype(jnp.bfloat16)
    if tm == 0:
        tm = 256
        x_in, pad_m = _pad_rows(x_in, tm)
        r_in, _ = _pad_rows(r_in, tm)
    else:
        pad_m = 0
    Mp = M + pad_m

    kern = functools.partial(_linear_res_ln_kernel, eps=eps)
    out = pl.pallas_call(
        kern,
        out_shape=jax.ShapeDtypeStruct((Mp, H), out_dtype),
        grid=(Mp // tm,),
        in_specs=[
            pl.BlockSpec((tm, K), lambda i: (i, 0)),
            pl.BlockSpec((K, H), lambda i: (0, 0)),
            pl.BlockSpec((1, H), lambda i: (0, 0)),
            pl.BlockSpec((tm, H), lambda i: (i, 0)),
            pl.BlockSpec((1, H), lambda i: (0, 0)),
            pl.BlockSpec((1, H), lambda i: (0, 0)),
        ],
        out_specs=pl.BlockSpec((tm, H), lambda i: (i, 0)),
        compiler_params=pltpu.CompilerParams(
            dimension_semantics=("parallel",),
            vmem_limit_bytes=_VMEM_LIMIT),
    )(x_in, w, b.reshape(1, H).astype(jnp.float32), r_in,
      gamma.reshape(1, H).astype(jnp.float32),
      beta.reshape(1, H).astype(jnp.float32))
    return out[:M] if pad_m else out


def _layernorm_kernel(x_ref, g_ref, b_ref, o_ref, *, eps):
    x = x_ref[...].astype(jnp.float32)
    mu = jnp.mean(x, axis=-1, keepdims=True)
    var = jnp.mean((x - mu) ** 2, axis=-1, keepdims=True)
    xn = (x - mu) * jax.lax.rsqrt(var + eps)
    o_ref[...] = (xn * g_ref[...] + b_ref[...]).astype(o_ref.dtype)


def pallas_layernorm(x, gamma, beta, out_dtype=jnp.bfloat16, eps=1e-12):
    """Row-tiled LayerNorm over last dim (used once, for the embeddings)."""
    M, H = x.shape
    tm = _choose_tile(M, 512, 256)
    if tm == 0:
        tm = 256
        x, pad_m = _pad_rows(x, tm)
    else:
        pad_m = 0
    Mp = M + pad_m

    kern = functools.partial(_layernorm_kernel, eps=eps)
    out = pl.pallas_call(
        kern,
        out_shape=jax.ShapeDtypeStruct((Mp, H), out_dtype),
        grid=(Mp // tm,),
        in_specs=[pl.BlockSpec((tm, H), lambda i: (i, 0)),
                  pl.BlockSpec((1, H), lambda i: (0, 0)),
                  pl.BlockSpec((1, H), lambda i: (0, 0))],
        out_specs=pl.BlockSpec((tm, H), lambda i: (i, 0)),
        compiler_params=pltpu.CompilerParams(
            dimension_semantics=("parallel",),
            vmem_limit_bytes=_VMEM_LIMIT),
    )(x, gamma.reshape(1, H).astype(jnp.float32),
      beta.reshape(1, H).astype(jnp.float32))
    return out[:M] if pad_m else out


def _attention_kernel(q_ref, k_ref, v_ref, bias_ref, o_ref, *, dh, hpb, scale):
    """One (batch, head-group) pair per step; hpb heads, scores only (S, S)."""
    bias = bias_ref[0]                           # (1, S) f32 additive key bias
    for h in range(hpb):                         # static unroll over head group
        q = q_ref[0, :, h * dh:(h + 1) * dh]     # (S, Dh) bf16
        k = k_ref[0, :, h * dh:(h + 1) * dh]
        v = v_ref[0, :, h * dh:(h + 1) * dh]
        s = jax.lax.dot_general(q, k, (((1,), (1,)), ((), ())),
                                preferred_element_type=jnp.float32) * scale
        s = s + bias
        s_max = jnp.max(s, axis=-1, keepdims=True)
        p = jnp.exp(s - s_max)
        denom = jnp.sum(p, axis=-1, keepdims=True)
        p = p * pl.reciprocal(denom, approx=True)        # divide on the EUP
        o = jnp.dot(p.astype(v.dtype), v, preferred_element_type=jnp.float32)
        o_ref[0, :, h * dh:(h + 1) * dh] = o.astype(o_ref.dtype)


def pallas_attention(qkv, attn_bias, *, n_heads):
    """qkv:[B,S,3H] bf16 (Q|K|V along the last dim); attn_bias:[B,1,S] f32.

    Reads Q/K/V via column-offset index_maps and writes context directly in
    [B,S,H] layout -> no head split/merge relayouts outside the kernel.
    """
    B, S, H3 = qkv.shape
    H = H3 // 3
    dh = H // n_heads
    # Smallest head-group making the block a multiple of 128 lanes (Dh=64 -> 2)
    hpb = 0
    for d in range(1, n_heads + 1):
        if n_heads % d == 0 and (d * dh) % 128 == 0:
            hpb = d
            break
    if hpb == 0:
        # TODO(synk): heads too narrow for a 128-lane block; fall back to one
        # block spanning all heads (lane-dense only when H % 128 == 0).
        hpb = n_heads
    G = n_heads // hpb                # head-group count == blocks per section
    W = hpb * dh                      # block width along the last dim

    kern = functools.partial(_attention_kernel, dh=dh, hpb=hpb,
                             scale=1.0 / math.sqrt(dh))
    blk = (1, S, W)
    # TODO(synk): for very long S add query tiling + online (flash) softmax;
    # whole-S scores keep the working set small for S up to ~1-2K.
    return pl.pallas_call(
        kern,
        out_shape=jax.ShapeDtypeStruct((B, S, H), jnp.bfloat16),
        grid=(B, G),
        in_specs=[
            pl.BlockSpec(blk, lambda b, g: (b, 0, g)),                 # Q cols
            pl.BlockSpec(blk, lambda b, g, G=G: (b, 0, G + g)),        # K cols
            pl.BlockSpec(blk, lambda b, g, G=G: (b, 0, 2 * G + g)),    # V cols
            pl.BlockSpec((1, 1, S), lambda b, g: (b, 0, 0)),           # bias
        ],
        out_specs=pl.BlockSpec(blk, lambda b, g: (b, 0, g)),
        compiler_params=pltpu.CompilerParams(
            dimension_semantics=("parallel", "parallel"),
            vmem_limit_bytes=_VMEM_LIMIT),
    )(qkv, qkv, qkv, attn_bias)


def _pool_cls_kernel(x_ref, wp_ref, bp_ref, wc_ref, bc_ref, o_ref):
    """Fused pooler + classifier: (tanh(x @ Wp + bp)) @ Wc + bc."""
    h = jnp.dot(x_ref[...], wp_ref[...], preferred_element_type=jnp.float32)
    h = jnp.tanh(h + bp_ref[...])
    y = jnp.dot(h.astype(wc_ref.dtype), wc_ref[...],
                preferred_element_type=jnp.float32)
    o_ref[...] = (y + bc_ref[...]).astype(o_ref.dtype)


def pallas_pooler_classifier(cls_tok, wp, bp, wc_pad, bc_pad, *, num_classes):
    """cls_tok:[B,H]; wc_pad/bc_pad pre-padded to 128 lanes at init."""
    B, H = cls_tok.shape
    Cp = wc_pad.shape[1]
    pad_b = (-B) % 8                                # pad batch to 8 sublanes
    x = cls_tok.astype(jnp.bfloat16)
    if pad_b:
        x = jnp.pad(x, ((0, pad_b), (0, 0)))
    out = pl.pallas_call(
        _pool_cls_kernel,
        out_shape=jax.ShapeDtypeStruct((B + pad_b, Cp), jnp.float32),
        compiler_params=pltpu.CompilerParams(vmem_limit_bytes=_VMEM_LIMIT),
    )(x, wp, bp.reshape(1, H).astype(jnp.float32),
      wc_pad, bc_pad.reshape(1, Cp).astype(jnp.float32))
    return out[:B, :num_classes]


# ----------------------------------------------------------------------------
# Deterministic parameter construction (synthetic "bert" + classifier)
# ----------------------------------------------------------------------------
def init_params(key, *, vocab, hidden, n_layers, n_heads, max_pos,
                ffn, num_classes, type_vocab=2):
    ks = iter(jax.random.split(key, 8 + 8 * n_layers))
    std = 0.02

    def nrm(shape):
        return std * jax.random.normal(next(ks), shape, dtype=jnp.float32)

    def w_bf16(shape):
        # Matmul weights stored in bf16 ONCE so the forward never re-converts
        # them (MXU consumes bf16; accumulation stays f32 in the kernels).
        return nrm(shape).astype(jnp.bfloat16)

    cpad = (-num_classes) % 128                    # lane-dense classifier cols
    cls_w = jnp.pad(nrm((hidden, num_classes)), ((0, 0), (0, cpad)))
    cls_b = jnp.pad(jnp.zeros((num_classes,), jnp.float32), (0, cpad))

    p = {
        "word_emb": nrm((vocab, hidden)),
        "pos_emb": nrm((max_pos, hidden)),
        "type_emb": nrm((type_vocab, hidden)),
        "emb_ln_g": jnp.ones((hidden,), jnp.float32),
        "emb_ln_b": jnp.zeros((hidden,), jnp.float32),
        "pool_w": w_bf16((hidden, hidden)),
        "pool_b": jnp.zeros((hidden,), jnp.float32),
        "cls_w": cls_w.astype(jnp.bfloat16),
        "cls_b": cls_b,
        "layers": [],
    }
    for _ in range(n_layers):
        p["layers"].append({
            # fused Q|K|V projection -> one matmul per layer
            "wqkv": w_bf16((hidden, 3 * hidden)),
            "bqkv": jnp.zeros((3 * hidden,), jnp.float32),
            "wo": w_bf16((hidden, hidden)),
            "bo": jnp.zeros((hidden,), jnp.float32),
            "ln1_g": jnp.ones((hidden,), jnp.float32),
            "ln1_b": jnp.zeros((hidden,), jnp.float32),
            "w1": w_bf16((hidden, ffn)),
            "b1": jnp.zeros((ffn,), jnp.float32),
            "w2": w_bf16((ffn, hidden)),
            "b2": jnp.zeros((hidden,), jnp.float32),
            "ln2_g": jnp.ones((hidden,), jnp.float32),
            "ln2_b": jnp.zeros((hidden,), jnp.float32),
        })
    return p


# ----------------------------------------------------------------------------
# Forward pass (== KoBERTClassifier.forward)
# ----------------------------------------------------------------------------
def gen_attention_mask(token_ids, valid_length):
    """attention_mask[i, :valid_length[i]] = 1 (matches the PyTorch loop)."""
    B, S = token_ids.shape
    pos = jnp.arange(S, dtype=jnp.int32)[None, :]
    return (pos < valid_length[:, None].astype(jnp.int32)).astype(jnp.float32)


def kobert_classifier_forward(params, token_ids, valid_length, segment_ids,
                              *, n_heads, num_classes, dr_rate=None):
    B, S = token_ids.shape
    H = params["word_emb"].shape[1]
    M = B * S

    attention_mask = gen_attention_mask(token_ids, valid_length)
    # Additive key bias hoisted out of the attention kernel; computed once per
    # forward and reused by every layer.
    attn_bias = ((1.0 - attention_mask) * -10000.0).reshape(B, 1, S)

    # ---- embeddings (gathers stay in JAX), embedding LayerNorm in Pallas ----
    emb = (params["word_emb"][token_ids]
           + params["pos_emb"][jnp.arange(S)][None, :, :]
           + params["type_emb"][segment_ids.astype(jnp.int32)])
    x = pallas_layernorm(emb.reshape(M, H),
                         params["emb_ln_g"], params["emb_ln_b"],
                         out_dtype=jnp.bfloat16)                   # [M,H] bf16

    # ---- transformer encoder layers ----
    for lyr in params["layers"]:
        qkv = pallas_linear(x, lyr["wqkv"], lyr["bqkv"])           # [M,3H] bf16
        # Attention reads Q/K/V straight out of the [B,S,3H] slab and writes
        # context straight back in [B,S,H] layout (no head split/merge).
        ctx = pallas_attention(qkv.reshape(B, S, 3 * H), attn_bias,
                               n_heads=n_heads).reshape(M, H)
        # wo matmul with residual-add + LayerNorm fused into its epilogue.
        x = pallas_linear_res_ln(ctx, lyr["wo"], lyr["bo"],
                                 x, lyr["ln1_g"], lyr["ln1_b"])
        ffn_h = pallas_linear(x, lyr["w1"], lyr["b1"], activation="gelu")
        # w2 matmul with residual-add + LayerNorm fused into its epilogue.
        x = pallas_linear_res_ln(ffn_h, lyr["w2"], lyr["b2"],
                                 x, lyr["ln2_g"], lyr["ln2_b"])

    # ---- fused pooler (tanh(W @ hidden[:,0])) + classifier head ----
    cls_tok = x.reshape(B, S, H)[:, 0, :]                          # [B, H]
    # TODO(synk): dropout (dr_rate) is inference-disabled here; default None.
    logits = pallas_pooler_classifier(cls_tok, params["pool_w"],
                                      params["pool_b"], params["cls_w"],
                                      params["cls_b"],
                                      num_classes=num_classes)
    return logits


# ----------------------------------------------------------------------------
if __name__ == "__main__":
    B, S = 2, 8
    HIDDEN, N_HEADS, N_LAYERS, FFN = 128, 2, 2, 512   # Dh=64, like real KoBERT
    VOCAB, NUM_CLASSES = 100, 5

    key = jax.random.PRNGKey(0)
    k_tok, k_seg, k_par = jax.random.split(key, 3)

    token_ids = jax.random.randint(k_tok, (B, S), 0, VOCAB, dtype=jnp.int32)
    segment_ids = jax.random.randint(k_seg, (B, S), 0, 2, dtype=jnp.int32)
    valid_length = jnp.array([S, S - 3], dtype=jnp.int32)

    params = init_params(k_par, vocab=VOCAB, hidden=HIDDEN, n_layers=N_LAYERS,
                         n_heads=N_HEADS, max_pos=S, ffn=FFN,
                         num_classes=NUM_CLASSES)

    fwd = jax.jit(functools.partial(kobert_classifier_forward,
                                    n_heads=N_HEADS, num_classes=NUM_CLASSES))
    logits = fwd(params, token_ids, valid_length, segment_ids)
    logits = jax.block_until_ready(logits)
    assert logits.shape == (B, NUM_CLASSES)
    assert bool(jnp.all(jnp.isfinite(logits)))
    print("KERNEL_OK")
</pallas_src>

<mosaic_0001>
module attributes {stable_mosaic.version = 11 : i64} {
  func.func @_linear_res_ln_kernel(%arg0: i32, %arg1: memref<16x128xbf16, #tpu.memory_space<vmem>>, %arg2: memref<128x128xbf16, #tpu.memory_space<vmem>>, %arg3: memref<1x128xf32, #tpu.memory_space<vmem>>, %arg4: memref<16x128xbf16, #tpu.memory_space<vmem>>, %arg5: memref<1x128xf32, #tpu.memory_space<vmem>>, %arg6: memref<1x128xf32, #tpu.memory_space<vmem>>, %arg7: memref<16x128xbf16, #tpu.memory_space<vmem>>) attributes {dimension_semantics = [#tpu.dimension_semantics<parallel>], iteration_bounds = array<i64: 1>, scalar_prefetch = 0 : i64, scratch_operands = 0 : i64, tpu.core_type = #tpu.core_type<tc>, window_params = [{transform_indices = @transform_0, window_bounds = array<i64: 16, 128>}, {pipeline_mode = #tpu.pipeline_mode<synchronous>, transform_indices = @transform_1, window_bounds = array<i64: 128, 128>}, {pipeline_mode = #tpu.pipeline_mode<synchronous>, transform_indices = @transform_2, window_bounds = array<i64: 1, 128>}, {transform_indices = @transform_3, window_bounds = array<i64: 16, 128>}, {pipeline_mode = #tpu.pipeline_mode<synchronous>, transform_indices = @transform_4, window_bounds = array<i64: 1, 128>}, {pipeline_mode = #tpu.pipeline_mode<synchronous>, transform_indices = @transform_5, window_bounds = array<i64: 1, 128>}, {transform_indices = @transform_6, window_bounds = array<i64: 16, 128>}]} {
    %c0 = arith.constant 0 : index
    %c0_0 = arith.constant 0 : index
    %0 = vector.load %arg1[%c0, %c0_0] : memref<16x128xbf16, #tpu.memory_space<vmem>>, vector<16x128xbf16>
    %c0_1 = arith.constant 0 : index
    %c0_2 = arith.constant 0 : index
    %1 = vector.load %arg2[%c0_1, %c0_2] : memref<128x128xbf16, #tpu.memory_space<vmem>>, vector<128x128xbf16>
    %cst = arith.constant dense<0.000000e+00> : vector<16x128xf32>
    %2 = tpu.matmul %0, %1, %cst {dimension_numbers = #tpu.dot_dimension_numbers<[1], [0], [0], [1], [0, 0, 1, 1], [], []>} : vector<16x128xbf16>, vector<128x128xbf16>, vector<16x128xf32> -> vector<16x128xf32>
    %c0_3 = arith.constant 0 : index
    %c0_4 = arith.constant 0 : index
    %3 = vector.load %arg3[%c0_3, %c0_4] : memref<1x128xf32, #tpu.memory_space<vmem>>, vector<1x128xf32>
    %4 = vector.broadcast %3 : vector<1x128xf32> to vector<16x128xf32>
    %5 = arith.addf %2, %4 : vector<16x128xf32>
    %c0_5 = arith.constant 0 : index
    %c0_6 = arith.constant 0 : index
    %6 = vector.load %arg4[%c0_5, %c0_6] : memref<16x128xbf16, #tpu.memory_space<vmem>>, vector<16x128xbf16>
    %7 = arith.extf %6 : vector<16x128xbf16> to vector<16x128xf32>
    %8 = arith.addf %5, %7 : vector<16x128xf32>
    %cst_7 = arith.constant dense<0.000000e+00> : vector<16xf32>
    %9 = vector.multi_reduction <add>, %8, %cst_7 [1] : vector<16x128xf32> to vector<16xf32>
    %10 = vector.shape_cast %9 : vector<16xf32> to vector<16x1xf32>
    %cst_8 = arith.constant 1.280000e+02 : f32
    %11 = vector.broadcast %cst_8 : f32 to vector<16x1xf32>
    %12 = arith.divf %10, %11 : vector<16x1xf32>
    %13 = vector.broadcast %12 : vector<16x1xf32> to vector<16x128xf32>
    %14 = arith.subf %8, %13 : vector<16x128xf32>
    %15 = arith.mulf %14, %14 : vector<16x128xf32>
    %cst_9 = arith.constant dense<0.000000e+00> : vector<16xf32>
    %16 = vector.multi_reduction <add>, %15, %cst_9 [1] : vector<16x128xf32> to vector<16xf32>
    %17 = vector.shape_cast %16 : vector<16xf32> to vector<16x1xf32>
    %cst_10 = arith.constant 1.280000e+02 : f32
    %18 = vector.broadcast %cst_10 : f32 to vector<16x1xf32>
    %19 = arith.divf %17, %18 : vector<16x1xf32>
    %20 = vector.broadcast %12 : vector<16x1xf32> to vector<16x128xf32>
    %21 = arith.subf %8, %20 : vector<16x128xf32>
    %cst_11 = arith.constant 9.99999996E-13 : f32
    %22 = vector.broadcast %cst_11 : f32 to vector<16x1xf32>
    %23 = arith.addf %19, %22 : vector<16x1xf32>
    %24 = math.rsqrt %23 : vector<16x1xf32>
    %25 = vector.broadcast %24 : vector<16x1xf32> to vector<16x128xf32>
    %26 = arith.mulf %21, %25 : vector<16x128xf32>
    %c0_12 = arith.constant 0 : index
    %c0_13 = arith.constant 0 : index
    %27 = vector.load %arg5[%c0_12, %c0_13] : memref<1x128xf32, #tpu.memory_space<vmem>>, vector<1x128xf32>
    %28 = vector.broadcast %27 : vector<1x128xf32> to vector<16x128xf32>
    %29 = arith.mulf %26, %28 : vector<16x128xf32>
    %c0_14 = arith.constant 0 : index
    %c0_15 = arith.constant 0 : index
    %30 = vector.load %arg6[%c0_14, %c0_15] : memref<1x128xf32, #tpu.memory_space<vmem>>, vector<1x128xf32>
    %31 = vector.broadcast %30 : vector<1x128xf32> to vector<16x128xf32>
    %32 = arith.addf %29, %31 : vector<16x128xf32>
    %33 = arith.truncf %32 : vector<16x128xf32> to vector<16x128xbf16>
    %c0_16 = arith.constant 0 : index
    %c0_17 = arith.constant 0 : index
    %34 = vector.load %arg7[%c0_16, %c0_17] : memref<16x128xbf16, #tpu.memory_space<vmem>>, vector<16x128xbf16>
    tpu.vector_store %arg7[%c0_16, %c0_17], %33 {strides = array<i32>} : memref<16x128xbf16, #tpu.memory_space<vmem>>, vector<16x128xbf16>,
    return
  }
  func.func @transform_0(%arg0: i32) -> (i32, i32) {
    %c0_i32 = arith.constant 0 : i32
    %c0_i32_0 = arith.constant 0 : i32
    return %arg0, %c0_i32 : i32, i32
  }
  func.func @transform_1(%arg0: i32) -> (i32, i32) {
    %c0_i32 = arith.constant 0 : i32
    %c0_i32_0 = arith.constant 0 : i32
    %c0_i32_1 = arith.constant 0 : i32
    return %c0_i32, %c0_i32_0 : i32, i32
  }
  func.func @transform_2(%arg0: i32) -> (i32, i32) {
    %c0_i32 = arith.constant 0 : i32
    %c0_i32_0 = arith.constant 0 : i32
    %c0_i32_1 = arith.constant 0 : i32
    return %c0_i32, %c0_i32_0 : i32, i32
  }
  func.func @transform_3(%arg0: i32) -> (i32, i32) {
    %c0_i32 = arith.constant 0 : i32
    %c0_i32_0 = arith.constant 0 : i32
    return %arg0, %c0_i32 : i32, i32
  }
  func.func @transform_4(%arg0: i32) -> (i32, i32) {
    %c0_i32 = arith.constant 0 : i32
    %c0_i32_0 = arith.constant 0 : i32
    %c0_i32_1 = arith.constant 0 : i32
    return %c0_i32, %c0_i32_0 : i32, i32
  }
  func.func @transform_5(%arg0: i32) -> (i32, i32) {
    %c0_i32 = arith.constant 0 : i32
    %c0_i32_0 = arith.constant 0 : i32
    %c0_i32_1 = arith.constant 0 : i32
    return %c0_i32, %c0_i32_0 : i32, i32
  }
  func.func @transform_6(%arg0: i32) -> (i32, i32) {
    %c0_i32 = arith.constant 0 : i32
    %c0_i32_0 = arith.constant 0 : i32
    return %arg0, %c0_i32 : i32, i32
  }
}

module attributes {stable_mosaic.version = 11 : i64} {
  func.func @_layernorm_kernel(%arg0: i32, %arg1: memref<16x128xf32, #tpu.memory_space<vmem>>, %arg2: memref<1x128xf32, #tpu.memory_space<vmem>>, %arg3: memref<1x128xf32, #tpu.memory_space<vmem>>, %arg4: memref<16x128xbf16, #tpu.memory_space<vmem>>) attributes {dimension_semantics = [#tpu.dimension_semantics<parallel>], iteration_bounds = array<i64: 1>, scalar_prefetch = 0 : i64, scratch_operands = 0 : i64, tpu.core_type = #tpu.core_type<tc>, window_params = [{transform_indices = @transform_0, window_bounds = array<i64: 16, 128>}, {pipeline_mode = #tpu.pipeline_mode<synchronous>, transform_indices = @transform_1, window_bounds = array<i64: 1, 128>}, {pipeline_mode = #tpu.pipeline_mode<synchronous>, transform_indices = @transform_2, window_bounds = array<i64: 1, 128>}, {transform_indices = @transform_3, window_bounds = array<i64: 16, 128>}]} {
    %c0 = arith.constant 0 : index
    %c0_0 = arith.constant 0 : index
    %0 = vector.load %arg1[%c0, %c0_0] : memref<16x128xf32, #tpu.memory_space<vmem>>, vector<16x128xf32>
    %cst = arith.constant dense<0.000000e+00> : vector<16xf32>
    %1 = vector.multi_reduction <add>, %0, %cst [1] : vector<16x128xf32> to vector<16xf32>
    %2 = vector.shape_cast %1 : vector<16xf32> to vector<16x1xf32>
    %cst_1 = arith.constant 1.280000e+02 : f32
    %3 = vector.broadcast %cst_1 : f32 to vector<16x1xf32>
    %4 = arith.divf %2, %3 : vector<16x1xf32>
    %5 = vector.broadcast %4 : vector<16x1xf32> to vector<16x128xf32>
    %6 = arith.subf %0, %5 : vector<16x128xf32>
    %7 = arith.mulf %6, %6 : vector<16x128xf32>
    %cst_2 = arith.constant dense<0.000000e+00> : vector<16xf32>
    %8 = vector.multi_reduction <add>, %7, %cst_2 [1] : vector<16x128xf32> to vector<16xf32>
    %9 = vector.shape_cast %8 : vector<16xf32> to vector<16x1xf32>
    %cst_3 = arith.constant 1.280000e+02 : f32
    %10 = vector.broadcast %cst_3 : f32 to vector<16x1xf32>
    %11 = arith.divf %9, %10 : vector<16x1xf32>
    %12 = vector.broadcast %4 : vector<16x1xf32> to vector<16x128xf32>
    %13 = arith.subf %0, %12 : vector<16x128xf32>
    %cst_4 = arith.constant 9.99999996E-13 : f32
    %14 = vector.broadcast %cst_4 : f32 to vector<16x1xf32>
    %15 = arith.addf %11, %14 : vector<16x1xf32>
    %16 = math.rsqrt %15 : vector<16x1xf32>
    %17 = vector.broadcast %16 : vector<16x1xf32> to vector<16x128xf32>
    %18 = arith.mulf %13, %17 : vector<16x128xf32>
    %c0_5 = arith.constant 0 : index
    %c0_6 = arith.constant 0 : index
    %19 = vector.load %arg2[%c0_5, %c0_6] : memref<1x128xf32, #tpu.memory_space<vmem>>, vector<1x128xf32>
    %20 = vector.broadcast %19 : vector<1x128xf32> to vector<16x128xf32>
    %21 = arith.mulf %18, %20 : vector<16x128xf32>
    %c0_7 = arith.constant 0 : index
    %c0_8 = arith.constant 0 : index
    %22 = vector.load %arg3[%c0_7, %c0_8] : memref<1x128xf32, #tpu.memory_space<vmem>>, vector<1x128xf32>
    %23 = vector.broadcast %22 : vector<1x128xf32> to vector<16x128xf32>
    %24 = arith.addf %21, %23 : vector<16x128xf32>
    %25 = arith.truncf %24 : vector<16x128xf32> to vector<16x128xbf16>
    %c0_9 = arith.constant 0 : index
    %c0_10 = arith.constant 0 : index
    %26 = vector.load %arg4[%c0_9, %c0_10] : memref<16x128xbf16, #tpu.memory_space<vmem>>, vector<16x128xbf16>
    tpu.vector_store %arg4[%c0_9, %c0_10], %25 {strides = array<i32>} : memref<16x128xbf16, #tpu.memory_space<vmem>>, vector<16x128xbf16>,
    return
  }
  func.func @transform_0(%arg0: i32) -> (i32, i32) {
    %c0_i32 = arith.constant 0 : i32
    %c0_i32_0 = arith.constant 0 : i32
    return %arg0, %c0_i32 : i32, i32
  }
  func.func @transform_1(%arg0: i32) -> (i32, i32) {
    %c0_i32 = arith.constant 0 : i32
    %c0_i32_0 = arith.constant 0 : i32
    %c0_i32_1 = arith.constant 0 : i32
    return %c0_i32, %c0_i32_0 : i32, i32
  }
  func.func @transform_2(%arg0: i32) -> (i32, i32) {
    %c0_i32 = arith.constant 0 : i32
    %c0_i32_0 = arith.constant 0 : i32
    %c0_i32_1 = arith.constant 0 : i32
    return %c0_i32, %c0_i32_0 : i32, i32
  }
  func.func @transform_3(%arg0: i32) -> (i32, i32) {
    %c0_i32 = arith.constant 0 : i32
    %c0_i32_0 = arith.constant 0 : i32
    return %arg0, %c0_i32 : i32, i32
  }
}

module attributes {stable_mosaic.version = 11 : i64} {
  func.func @_linear_kernel(%arg0: i32, %arg1: i32, %arg2: memref<16x128xbf16, #tpu.memory_space<vmem>>, %arg3: memref<128x384xbf16, #tpu.memory_space<vmem>>, %arg4: memref<1x384xf32, #tpu.memory_space<vmem>>, %arg5: memref<16x384xbf16, #tpu.memory_space<vmem>>) attributes {dimension_semantics = [#tpu.dimension_semantics<parallel>, #tpu.dimension_semantics<parallel>], iteration_bounds = array<i64: 1, 1>, scalar_prefetch = 0 : i64, scratch_operands = 0 : i64, tpu.core_type = #tpu.core_type<tc>, window_params = [{transform_indices = @transform_0, window_bounds = array<i64: 16, 128>}, {transform_indices = @transform_1, window_bounds = array<i64: 128, 384>}, {transform_indices = @transform_2, window_bounds = array<i64: 1, 384>}, {transform_indices = @transform_3, window_bounds = array<i64: 16, 384>}]} {
    %c0 = arith.constant 0 : index
    %c0_0 = arith.constant 0 : index
    %0 = vector.load %arg2[%c0, %c0_0] : memref<16x128xbf16, #tpu.memory_space<vmem>>, vector<16x128xbf16>
    %c0_1 = arith.constant 0 : index
    %c0_2 = arith.constant 0 : index
    %1 = vector.load %arg3[%c0_1, %c0_2] : memref<128x384xbf16, #tpu.memory_space<vmem>>, vector<128x384xbf16>
    %cst = arith.constant dense<0.000000e+00> : vector<16x384xf32>
    %2 = tpu.matmul %0, %1, %cst {dimension_numbers = #tpu.dot_dimension_numbers<[1], [0], [0], [1], [0, 0, 1, 1], [], []>} : vector<16x128xbf16>, vector<128x384xbf16>, vector<16x384xf32> -> vector<16x384xf32>
    %c0_3 = arith.constant 0 : index
    %c0_4 = arith.constant 0 : index
    %3 = vector.load %arg4[%c0_3, %c0_4] : memref<1x384xf32, #tpu.memory_space<vmem>>, vector<1x384xf32>
    %4 = vector.broadcast %3 : vector<1x384xf32> to vector<16x384xf32>
    %5 = arith.addf %2, %4 : vector<16x384xf32>
    %6 = arith.truncf %5 : vector<16x384xf32> to vector<16x384xbf16>
    %c0_5 = arith.constant 0 : index
    %c0_6 = arith.constant 0 : index
    %7 = vector.load %arg5[%c0_5, %c0_6] : memref<16x384xbf16, #tpu.memory_space<vmem>>, vector<16x384xbf16>
    tpu.vector_store %arg5[%c0_5, %c0_6], %6 {strides = array<i32>} : memref<16x384xbf16, #tpu.memory_space<vmem>>, vector<16x384xbf16>,
    return
  }
  func.func @transform_0(%arg0: i32, %arg1: i32) -> (i32, i32) {
    %c0_i32 = arith.constant 0 : i32
    %c0_i32_0 = arith.constant 0 : i32
    return %arg0, %c0_i32 : i32, i32
  }
  func.func @transform_1(%arg0: i32, %arg1: i32) -> (i32, i32) {
    %c0_i32 = arith.constant 0 : i32
    %c0_i32_0 = arith.constant 0 : i32
    return %c0_i32, %arg1 : i32, i32
  }
  func.func @transform_2(%arg0: i32, %arg1: i32) -> (i32, i32) {
    %c0_i32 = arith.constant 0 : i32
    %c0_i32_0 = arith.constant 0 : i32
    return %c0_i32, %arg1 : i32, i32
  }
  func.func @transform_3(%arg0: i32, %arg1: i32) -> (i32, i32) {
    %c0_i32 = arith.constant 0 : i32
    return %arg0, %arg1 : i32, i32
  }
}

module attributes {stable_mosaic.version = 11 : i64} {
  func.func @_attention_kernel(%arg0: i32, %arg1: i32, %arg2: memref<1x8x128xbf16, #tpu.memory_space<vmem>>, %arg3: memref<1x8x128xbf16, #tpu.memory_space<vmem>>, %arg4: memref<1x8x128xbf16, #tpu.memory_space<vmem>>, %arg5: memref<1x1x8xf32, #tpu.memory_space<vmem>>, %arg6: memref<1x8x128xbf16, #tpu.memory_space<vmem>>) attributes {dimension_semantics = [#tpu.dimension_semantics<parallel>, #tpu.dimension_semantics<parallel>], iteration_bounds = array<i64: 2, 1>, scalar_prefetch = 0 : i64, scratch_operands = 0 : i64, tpu.core_type = #tpu.core_type<tc>, window_params = [{transform_indices = @transform_0, window_bounds = array<i64: 1, 8, 128>}, {transform_indices = @transform_1, window_bounds = array<i64: 1, 8, 128>}, {transform_indices = @transform_2, window_bounds = array<i64: 1, 8, 128>}, {transform_indices = @transform_3, window_bounds = array<i64: 1, 1, 8>}, {transform_indices = @transform_4, window_bounds = array<i64: 1, 8, 128>}]} {
    %c0 = arith.constant 0 : index
    %c0_0 = arith.constant 0 : index
    %c0_1 = arith.constant 0 : index
    %0 = vector.load %arg5[%c0, %c0_0, %c0_1] : memref<1x1x8xf32, #tpu.memory_space<vmem>>, vector<1x1x8xf32>
    %1 = vector.shape_cast %0 : vector<1x1x8xf32> to vector<1x8xf32>
    %c0_2 = arith.constant 0 : index
    %c0_3 = arith.constant 0 : index
    %c0_4 = arith.constant 0 : index
    %2 = vector.load %arg2[%c0_2, %c0_3, %c0_4] : memref<1x8x128xbf16, #tpu.memory_space<vmem>>, vector<1x8x64xbf16>
    %3 = vector.shape_cast %2 : vector<1x8x64xbf16> to vector<8x64xbf16>
    %c0_5 = arith.constant 0 : index
    %c0_6 = arith.constant 0 : index
    %c0_7 = arith.constant 0 : index
    %4 = vector.load %arg3[%c0_5, %c0_6, %c0_7] : memref<1x8x128xbf16, #tpu.memory_space<vmem>>, vector<1x8x64xbf16>
    %5 = vector.shape_cast %4 : vector<1x8x64xbf16> to vector<8x64xbf16>
    %c0_8 = arith.constant 0 : index
    %c0_9 = arith.constant 0 : index
    %c0_10 = arith.constant 0 : index
    %6 = vector.load %arg4[%c0_8, %c0_9, %c0_10] : memref<1x8x128xbf16, #tpu.memory_space<vmem>>, vector<1x8x64xbf16>
    %7 = vector.shape_cast %6 : vector<1x8x64xbf16> to vector<8x64xbf16>
    %cst = arith.constant dense<0.000000e+00> : vector<8x8xf32>
    %8 = tpu.matmul %3, %5, %cst {dimension_numbers = #tpu.dot_dimension_numbers<[1], [1], [0], [0], [0, 0, 1, 0], [], []>} : vector<8x64xbf16>, vector<8x64xbf16>, vector<8x8xf32> -> vector<8x8xf32>
    %cst_11 = arith.constant 1.250000e-01 : f32
    %9 = vector.broadcast %cst_11 : f32 to vector<8x8xf32>
    %10 = arith.mulf %8, %9 : vector<8x8xf32>
    %11 = vector.broadcast %1 : vector<1x8xf32> to vector<8x8xf32>
    %12 = arith.addf %10, %11 : vector<8x8xf32>
    %cst_12 = arith.constant dense<0xFF800000> : vector<8xf32>
    %13 = vector.multi_reduction <maximumf>, %12, %cst_12 [1] : vector<8x8xf32> to vector<8xf32>
    %14 = vector.shape_cast %13 : vector<8xf32> to vector<8x1xf32>
    %15 = vector.broadcast %14 : vector<8x1xf32> to vector<8x8xf32>
    %16 = arith.subf %12, %15 : vector<8x8xf32>
    %17 = math.exp %16 : vector<8x8xf32>
    %cst_13 = arith.constant dense<0.000000e+00> : vector<8xf32>
    %18 = vector.multi_reduction <add>, %17, %cst_13 [1] : vector<8x8xf32> to vector<8xf32>
    %19 = vector.shape_cast %18 : vector<8xf32> to vector<8x1xf32>
    %20 = tpu.reciprocal %19 {approx = true} : vector<8x1xf32> -> vector<8x1xf32>
    %21 = vector.broadcast %20 : vector<8x1xf32> to vector<8x8xf32>
    %22 = arith.mulf %17, %21 : vector<8x8xf32>
    %23 = arith.truncf %22 : vector<8x8xf32> to vector<8x8xbf16>
    %cst_14 = arith.constant dense<0.000000e+00> : vector<8x64xf32>
    %24 = tpu.matmul %23, %7, %cst_14 {dimension_numbers = #tpu.dot_dimension_numbers<[1], [0], [0], [1], [0, 0, 1, 1], [], []>} : vector<8x8xbf16>, vector<8x64xbf16>, vector<8x64xf32> -> vector<8x64xf32>
    %25 = arith.truncf %24 : vector<8x64xf32> to vector<8x64xbf16>
    %c0_15 = arith.constant 0 : index
    %c0_16 = arith.constant 0 : index
    %c0_17 = arith.constant 0 : index
    %26 = vector.load %arg6[%c0_15, %c0_16, %c0_17] : memref<1x8x128xbf16, #tpu.memory_space<vmem>>, vector<1x8x64xbf16>
    %27 = vector.shape_cast %26 : vector<1x8x64xbf16> to vector<8x64xbf16>
    %28 = vector.shape_cast %25 : vector<8x64xbf16> to vector<1x8x64xbf16>
    tpu.vector_store %arg6[%c0_15, %c0_16, %c0_17], %28 {strides = array<i32>} : memref<1x8x128xbf16, #tpu.memory_space<vmem>>, vector<1x8x64xbf16>,
    %c0_18 = arith.constant 0 : index
    %c0_19 = arith.constant 0 : index
    %c64 = arith.constant 64 : index
    %29 = vector.load %arg2[%c0_18, %c0_19, %c64] : memref<1x8x128xbf16, #tpu.memory_space<vmem>>, vector<1x8x64xbf16>
    %30 = vector.shape_cast %29 : vector<1x8x64xbf16> to vector<8x64xbf16>
    %c0_20 = arith.constant 0 : index
    %c0_21 = arith.constant 0 : index
    %c64_22 = arith.constant 64 : index
    %31 = vector.load %arg3[%c0_20, %c0_21, %c64_22] : memref<1x8x128xbf16, #tpu.memory_space<vmem>>, vector<1x8x64xbf16>
    %32 = vector.shape_cast %31 : vector<1x8x64xbf16> to vector<8x64xbf16>
    %c0_23 = arith.constant 0 : index
    %c0_24 = arith.constant 0 : index
    %c64_25 = arith.constant 64 : index
    %33 = vector.load %arg4[%c0_23, %c0_24, %c64_25] : memref<1x8x128xbf16, #tpu.memory_space<vmem>>, vector<1x8x64xbf16>
    %34 = vector.shape_cast %33 : vector<1x8x64xbf16> to vector<8x64xbf16>
    %cst_26 = arith.constant dense<0.000000e+00> : vector<8x8xf32>
    %35 = tpu.matmul %30, %32, %cst_26 {dimension_numbers = #tpu.dot_dimension_numbers<[1], [1], [0], [0], [0, 0, 1, 0], [], []>} : vector<8x64xbf16>, vector<8x64xbf16>, vector<8x8xf32> -> vector<8x8xf32>
    %cst_27 = arith.constant 1.250000e-01 : f32
    %36 = vector.broadcast %cst_27 : f32 to vector<8x8xf32>
    %37 = arith.mulf %35, %36 : vector<8x8xf32>
    %38 = vector.broadcast %1 : vector<1x8xf32> to vector<8x8xf32>
    %39 = arith.addf %37, %38 : vector<8x8xf32>
    %cst_28 = arith.constant dense<0xFF800000> : vector<8xf32>
    %40 = vector.multi_reduction <maximumf>, %39, %cst_28 [1] : vector<8x8xf32> to vector<8xf32>
    %41 = vector.shape_cast %40 : vector<8xf32> to vector<8x1xf32>
    %42 = vector.broadcast %41 : vector<8x1xf32> to vector<8x8xf32>
    %43 = arith.subf %39, %42 : vector<8x8xf32>
    %44 = math.exp %43 : vector<8x8xf32>
    %cst_29 = arith.constant dense<0.000000e+00> : vector<8xf32>
    %45 = vector.multi_reduction <add>, %44, %cst_29 [1] : vector<8x8xf32> to vector<8xf32>
    %46 = vector.shape_cast %45 : vector<8xf32> to vector<8x1xf32>
    %47 = tpu.reciprocal %46 {approx = true} : vector<8x1xf32> -> vector<8x1xf32>
    %48 = vector.broadcast %47 : vector<8x1xf32> to vector<8x8xf32>
    %49 = arith.mulf %44, %48 : vector<8x8xf32>
    %50 = arith.truncf %49 : vector<8x8xf32> to vector<8x8xbf16>
    %cst_30 = arith.constant dense<0.000000e+00> : vector<8x64xf32>
    %51 = tpu.matmul %50, %34, %cst_30 {dimension_numbers = #tpu.dot_dimension_numbers<[1], [0], [0], [1], [0, 0, 1, 1], [], []>} : vector<8x8xbf16>, vector<8x64xbf16>, vector<8x64xf32> -> vector<8x64xf32>
    %52 = arith.truncf %51 : vector<8x64xf32> to vector<8x64xbf16>
    %c0_31 = arith.constant 0 : index
    %c0_32 = arith.constant 0 : index
    %c64_33 = arith.constant 64 : index
    %53 = vector.load %arg6[%c0_31, %c0_32, %c64_33] : memref<1x8x128xbf16, #tpu.memory_space<vmem>>, vector<1x8x64xbf16>
    %54 = vector.shape_cast %53 : vector<1x8x64xbf16> to vector<8x64xbf16>
    %55 = vector.shape_cast %52 : vector<8x64xbf16> to vector<1x8x64xbf16>
    tpu.vector_store %arg6[%c0_31, %c0_32, %c64_33], %55 {strides = array<i32>} : memref<1x8x128xbf16, #tpu.memory_space<vmem>>, vector<1x8x64xbf16>,
    return
  }
  func.func @transform_0(%arg0: i32, %arg1: i32) -> (i32, i32, i32) {
    %c0_i32 = arith.constant 0 : i32
    %c0_i32_0 = arith.constant 0 : i32
    return %arg0, %c0_i32, %arg1 : i32, i32, i32
  }
  func.func @transform_1(%arg0: i32, %arg1: i32) -> (i32, i32, i32) {
    %c1_i32 = arith.constant 1 : i32
    %0 = arith.addi %c1_i32, %arg1 : i32
    %c0_i32 = arith.constant 0 : i32
    %c0_i32_0 = arith.constant 0 : i32
    return %arg0, %c0_i32, %0 : i32, i32, i32
  }
  func.func @transform_2(%arg0: i32, %arg1: i32) -> (i32, i32, i32) {
    %c2_i32 = arith.constant 2 : i32
    %0 = arith.addi %c2_i32, %arg1 : i32
    %c0_i32 = arith.constant 0 : i32
    %c0_i32_0 = arith.constant 0 : i32
    return %arg0, %c0_i32, %0 : i32, i32, i32
  }
  func.func @transform_3(%arg0: i32, %arg1: i32) -> (i32, i32, i32) {
    %c0_i32 = arith.constant 0 : i32
    %c0_i32_0 = arith.constant 0 : i32
    %c0_i32_1 = arith.constant 0 : i32
    return %arg0, %c0_i32, %c0_i32_0 : i32, i32, i32
  }
  func.func @transform_4(%arg0: i32, %arg1: i32) -> (i32, i32, i32) {
    %c0_i32 = arith.constant 0 : i32
    %c0_i32_0 = arith.constant 0 : i32
    return %arg0, %c0_i32, %arg1 : i32, i32, i32
  }
}

module attributes {stable_mosaic.version = 11 : i64} {
  func.func @_linear_kernel(%arg0: i32, %arg1: i32, %arg2: memref<16x128xbf16, #tpu.memory_space<vmem>>, %arg3: memref<128x512xbf16, #tpu.memory_space<vmem>>, %arg4: memref<1x512xf32, #tpu.memory_space<vmem>>, %arg5: memref<16x512xbf16, #tpu.memory_space<vmem>>) attributes {dimension_semantics = [#tpu.dimension_semantics<parallel>, #tpu.dimension_semantics<parallel>], iteration_bounds = array<i64: 1, 1>, scalar_prefetch = 0 : i64, scratch_operands = 0 : i64, tpu.core_type = #tpu.core_type<tc>, window_params = [{transform_indices = @transform_0, window_bounds = array<i64: 16, 128>}, {transform_indices = @transform_1, window_bounds = array<i64: 128, 512>}, {transform_indices = @transform_2, window_bounds = array<i64: 1, 512>}, {transform_indices = @transform_3, window_bounds = array<i64: 16, 512>}]} {
    %c0 = arith.constant 0 : index
    %c0_0 = arith.constant 0 : index
    %0 = vector.load %arg2[%c0, %c0_0] : memref<16x128xbf16, #tpu.memory_space<vmem>>, vector<16x128xbf16>
    %c0_1 = arith.constant 0 : index
    %c0_2 = arith.constant 0 : index
    %1 = vector.load %arg3[%c0_1, %c0_2] : memref<128x512xbf16, #tpu.memory_space<vmem>>, vector<128x512xbf16>
    %cst = arith.constant dense<0.000000e+00> : vector<16x512xf32>
    %2 = tpu.matmul %0, %1, %cst {dimension_numbers = #tpu.dot_dimension_numbers<[1], [0], [0], [1], [0, 0, 1, 1], [], []>} : vector<16x128xbf16>, vector<128x512xbf16>, vector<16x512xf32> -> vector<16x512xf32>
    %c0_3 = arith.constant 0 : index
    %c0_4 = arith.constant 0 : index
    %3 = vector.load %arg4[%c0_3, %c0_4] : memref<1x512xf32, #tpu.memory_space<vmem>>, vector<1x512xf32>
    %4 = vector.broadcast %3 : vector<1x512xf32> to vector<16x512xf32>
    %5 = arith.addf %2, %4 : vector<16x512xf32>
    %cst_5 = arith.constant 5.000000e-01 : f32
    %6 = vector.broadcast %cst_5 : f32 to vector<16x512xf32>
    %7 = arith.mulf %6, %5 : vector<16x512xf32>
    %cst_6 = arith.constant 4.471500e-02 : f32
    %8 = vector.broadcast %cst_6 : f32 to vector<16x512xf32>
    %9 = arith.mulf %8, %5 : vector<16x512xf32>
    %10 = arith.mulf %9, %5 : vector<16x512xf32>
    %11 = arith.mulf %10, %5 : vector<16x512xf32>
    %12 = arith.addf %5, %11 : vector<16x512xf32>
    %cst_7 = arith.constant 0.797884583 : f32
    %13 = vector.broadcast %cst_7 : f32 to vector<16x512xf32>
    %14 = arith.mulf %13, %12 : vector<16x512xf32>
    %15 = math.tanh %14 : vector<16x512xf32>
    %cst_8 = arith.constant 1.000000e+00 : f32
    %16 = vector.broadcast %cst_8 : f32 to vector<16x512xf32>
    %17 = arith.addf %16, %15 : vector<16x512xf32>
    %18 = arith.mulf %7, %17 : vector<16x512xf32>
    %19 = arith.truncf %18 : vector<16x512xf32> to vector<16x512xbf16>
    %c0_9 = arith.constant 0 : index
    %c0_10 = arith.constant 0 : index
    %20 = vector.load %arg5[%c0_9, %c0_10] : memref<16x512xbf16, #tpu.memory_space<vmem>>, vector<16x512xbf16>
    tpu.vector_store %arg5[%c0_9, %c0_10], %19 {strides = array<i32>} : memref<16x512xbf16, #tpu.memory_space<vmem>>, vector<16x512xbf16>,
    return
  }
  func.func @transform_0(%arg0: i32, %arg1: i32) -> (i32, i32) {
    %c0_i32 = arith.constant 0 : i32
    %c0_i32_0 = arith.constant 0 : i32
    return %arg0, %c0_i32 : i32, i32
  }
  func.func @transform_1(%arg0: i32, %arg1: i32) -> (i32, i32) {
    %c0_i32 = arith.constant 0 : i32
    %c0_i32_0 = arith.constant 0 : i32
    return %c0_i32, %arg1 : i32, i32
  }
  func.func @transform_2(%arg0: i32, %arg1: i32) -> (i32, i32) {
    %c0_i32 = arith.constant 0 : i32
    %c0_i32_0 = arith.constant 0 : i32
    return %c0_i32, %arg1 : i32, i32
  }
  func.func @transform_3(%arg0: i32, %arg1: i32) -> (i32, i32) {
    %c0_i32 = arith.constant 0 : i32
    return %arg0, %arg1 : i32, i32
  }
}

module attributes {stable_mosaic.version = 11 : i64} {
  func.func @_linear_res_ln_kernel(%arg0: i32, %arg1: memref<16x512xbf16, #tpu.memory_space<vmem>>, %arg2: memref<512x128xbf16, #tpu.memory_space<vmem>>, %arg3: memref<1x128xf32, #tpu.memory_space<vmem>>, %arg4: memref<16x128xbf16, #tpu.memory_space<vmem>>, %arg5: memref<1x128xf32, #tpu.memory_space<vmem>>, %arg6: memref<1x128xf32, #tpu.memory_space<vmem>>, %arg7: memref<16x128xbf16, #tpu.memory_space<vmem>>) attributes {dimension_semantics = [#tpu.dimension_semantics<parallel>], iteration_bounds = array<i64: 1>, scalar_prefetch = 0 : i64, scratch_operands = 0 : i64, tpu.core_type = #tpu.core_type<tc>, window_params = [{transform_indices = @transform_0, window_bounds = array<i64: 16, 512>}, {pipeline_mode = #tpu.pipeline_mode<synchronous>, transform_indices = @transform_1, window_bounds = array<i64: 512, 128>}, {pipeline_mode = #tpu.pipeline_mode<synchronous>, transform_indices = @transform_2, window_bounds = array<i64: 1, 128>}, {transform_indices = @transform_3, window_bounds = array<i64: 16, 128>}, {pipeline_mode = #tpu.pipeline_mode<synchronous>, transform_indices = @transform_4, window_bounds = array<i64: 1, 128>}, {pipeline_mode = #tpu.pipeline_mode<synchronous>, transform_indices = @transform_5, window_bounds = array<i64: 1, 128>}, {transform_indices = @transform_6, window_bounds = array<i64: 16, 128>}]} {
    %c0 = arith.constant 0 : index
    %c0_0 = arith.constant 0 : index
    %0 = vector.load %arg1[%c0, %c0_0] : memref<16x512xbf16, #tpu.memory_space<vmem>>, vector<16x512xbf16>
    %c0_1 = arith.constant 0 : index
    %c0_2 = arith.constant 0 : index
    %1 = vector.load %arg2[%c0_1, %c0_2] : memref<512x128xbf16, #tpu.memory_space<vmem>>, vector<512x128xbf16>
    %cst = arith.constant dense<0.000000e+00> : vector<16x128xf32>
    %2 = tpu.matmul %0, %1, %cst {dimension_numbers = #tpu.dot_dimension_numbers<[1], [0], [0], [1], [0, 0, 1, 1], [], []>} : vector<16x512xbf16>, vector<512x128xbf16>, vector<16x128xf32> -> vector<16x128xf32>
    %c0_3 = arith.constant 0 : index
    %c0_4 = arith.constant 0 : index
    %3 = vector.load %arg3[%c0_3, %c0_4] : memref<1x128xf32, #tpu.memory_space<vmem>>, vector<1x128xf32>
    %4 = vector.broadcast %3 : vector<1x128xf32> to vector<16x128xf32>
    %5 = arith.addf %2, %4 : vector<16x128xf32>
    %c0_5 = arith.constant 0 : index
    %c0_6 = arith.constant 0 : index
    %6 = vector.load %arg4[%c0_5, %c0_6] : memref<16x128xbf16, #tpu.memory_space<vmem>>, vector<16x128xbf16>
    %7 = arith.extf %6 : vector<16x128xbf16> to vector<16x128xf32>
    %8 = arith.addf %5, %7 : vector<16x128xf32>
    %cst_7 = arith.constant dense<0.000000e+00> : vector<16xf32>
    %9 = vector.multi_reduction <add>, %8, %cst_7 [1] : vector<16x128xf32> to vector<16xf32>
    %10 = vector.shape_cast %9 : vector<16xf32> to vector<16x1xf32>
    %cst_8 = arith.constant 1.280000e+02 : f32
    %11 = vector.broadcast %cst_8 : f32 to vector<16x1xf32>
    %12 = arith.divf %10, %11 : vector<16x1xf32>
    %13 = vector.broadcast %12 : vector<16x1xf32> to vector<16x128xf32>
    %14 = arith.subf %8, %13 : vector<16x128xf32>
    %15 = arith.mulf %14, %14 : vector<16x128xf32>
    %cst_9 = arith.constant dense<0.000000e+00> : vector<16xf32>
    %16 = vector.multi_reduction <add>, %15, %cst_9 [1] : vector<16x128xf32> to vector<16xf32>
    %17 = vector.shape_cast %16 : vector<16xf32> to vector<16x1xf32>
    %cst_10 = arith.constant 1.280000e+02 : f32
    %18 = vector.broadcast %cst_10 : f32 to vector<16x1xf32>
    %19 = arith.divf %17, %18 : vector<16x1xf32>
    %20 = vector.broadcast %12 : vector<16x1xf32> to vector<16x128xf32>
    %21 = arith.subf %8, %20 : vector<16x128xf32>
    %cst_11 = arith.constant 9.99999996E-13 : f32
    %22 = vector.broadcast %cst_11 : f32 to vector<16x1xf32>
    %23 = arith.addf %19, %22 : vector<16x1xf32>
    %24 = math.rsqrt %23 : vector<16x1xf32>
    %25 = vector.broadcast %24 : vector<16x1xf32> to vector<16x128xf32>
    %26 = arith.mulf %21, %25 : vector<16x128xf32>
    %c0_12 = arith.constant 0 : index
    %c0_13 = arith.constant 0 : index
    %27 = vector.load %arg5[%c0_12, %c0_13] : memref<1x128xf32, #tpu.memory_space<vmem>>, vector<1x128xf32>
    %28 = vector.broadcast %27 : vector<1x128xf32> to vector<16x128xf32>
    %29 = arith.mulf %26, %28 : vector<16x128xf32>
    %c0_14 = arith.constant 0 : index
    %c0_15 = arith.constant 0 : index
    %30 = vector.load %arg6[%c0_14, %c0_15] : memref<1x128xf32, #tpu.memory_space<vmem>>, vector<1x128xf32>
    %31 = vector.broadcast %30 : vector<1x128xf32> to vector<16x128xf32>
    %32 = arith.addf %29, %31 : vector<16x128xf32>
    %33 = arith.truncf %32 : vector<16x128xf32> to vector<16x128xbf16>
    %c0_16 = arith.constant 0 : index
    %c0_17 = arith.constant 0 : index
    %34 = vector.load %arg7[%c0_16, %c0_17] : memref<16x128xbf16, #tpu.memory_space<vmem>>, vector<16x128xbf16>
    tpu.vector_store %arg7[%c0_16, %c0_17], %33 {strides = array<i32>} : memref<16x128xbf16, #tpu.memory_space<vmem>>, vector<16x128xbf16>,
    return
  }
  func.func @transform_0(%arg0: i32) -> (i32, i32) {
    %c0_i32 = arith.constant 0 : i32
    %c0_i32_0 = arith.constant 0 : i32
    return %arg0, %c0_i32 : i32, i32
  }
  func.func @transform_1(%arg0: i32) -> (i32, i32) {
    %c0_i32 = arith.constant 0 : i32
    %c0_i32_0 = arith.constant 0 : i32
    %c0_i32_1 = arith.constant 0 : i32
    return %c0_i32, %c0_i32_0 : i32, i32
  }
  func.func @transform_2(%arg0: i32) -> (i32, i32) {
    %c0_i32 = arith.constant 0 : i32
    %c0_i32_0 = arith.constant 0 : i32
    %c0_i32_1 = arith.constant 0 : i32
    return %c0_i32, %c0_i32_0 : i32, i32
  }
  func.func @transform_3(%arg0: i32) -> (i32, i32) {
    %c0_i32 = arith.constant 0 : i32
    %c0_i32_0 = arith.constant 0 : i32
    return %arg0, %c0_i32 : i32, i32
  }
  func.func @transform_4(%arg0: i32) -> (i32, i32) {
    %c0_i32 = arith.constant 0 : i32
    %c0_i32_0 = arith.constant 0 : i32
    %c0_i32_1 = arith.constant 0 : i32
    return %c0_i32, %c0_i32_0 : i32, i32
  }
  func.func @transform_5(%arg0: i32) -> (i32, i32) {
    %c0_i32 = arith.constant 0 : i32
    %c0_i32_0 = arith.constant 0 : i32
    %c0_i32_1 = arith.constant 0 : i32
    return %c0_i32, %c0_i32_0 : i32, i32
  }
  func.func @transform_6(%arg0: i32) -> (i32, i32) {
    %c0_i32 = arith.constant 0 : i32
    %c0_i32_0 = arith.constant 0 : i32
    return %arg0, %c0_i32 : i32, i32
  }
}

module attributes {stable_mosaic.version = 11 : i64} {
  func.func @_pool_cls_kernel(%arg0: memref<8x128xbf16, #tpu.memory_space<vmem>>, %arg1: memref<128x128xbf16, #tpu.memory_space<vmem>>, %arg2: memref<1x128xf32, #tpu.memory_space<vmem>>, %arg3: memref<128x128xbf16, #tpu.memory_space<vmem>>, %arg4: memref<1x128xf32, #tpu.memory_space<vmem>>, %arg5: memref<8x128xf32, #tpu.memory_space<vmem>>) attributes {dimension_semantics = [], scalar_prefetch = 0 : i64, scratch_operands = 0 : i64, tpu.core_type = #tpu.core_type<tc>} {
    %c0 = arith.constant 0 : index
    %c0_0 = arith.constant 0 : index
    %0 = vector.load %arg0[%c0, %c0_0] : memref<8x128xbf16, #tpu.memory_space<vmem>>, vector<8x128xbf16>
    %c0_1 = arith.constant 0 : index
    %c0_2 = arith.constant 0 : index
    %1 = vector.load %arg1[%c0_1, %c0_2] : memref<128x128xbf16, #tpu.memory_space<vmem>>, vector<128x128xbf16>
    %cst = arith.constant dense<0.000000e+00> : vector<8x128xf32>
    %2 = tpu.matmul %0, %1, %cst {dimension_numbers = #tpu.dot_dimension_numbers<[1], [0], [0], [1], [0, 0, 1, 1], [], []>} : vector<8x128xbf16>, vector<128x128xbf16>, vector<8x128xf32> -> vector<8x128xf32>
    %c0_3 = arith.constant 0 : index
    %c0_4 = arith.constant 0 : index
    %3 = vector.load %arg2[%c0_3, %c0_4] : memref<1x128xf32, #tpu.memory_space<vmem>>, vector<1x128xf32>
    %4 = vector.broadcast %3 : vector<1x128xf32> to vector<8x128xf32>
    %5 = arith.addf %2, %4 : vector<8x128xf32>
    %6 = math.tanh %5 : vector<8x128xf32>
    %7 = arith.truncf %6 : vector<8x128xf32> to vector<8x128xbf16>
    %c0_5 = arith.constant 0 : index
    %c0_6 = arith.constant 0 : index
    %8 = vector.load %arg3[%c0_5, %c0_6] : memref<128x128xbf16, #tpu.memory_space<vmem>>, vector<128x128xbf16>
    %cst_7 = arith.constant dense<0.000000e+00> : vector<8x128xf32>
    %9 = tpu.matmul %7, %8, %cst_7 {dimension_numbers = #tpu.dot_dimension_numbers<[1], [0], [0], [1], [0, 0, 1, 1], [], []>} : vector<8x128xbf16>, vector<128x128xbf16>, vector<8x128xf32> -> vector<8x128xf32>
    %c0_8 = arith.constant 0 : index
    %c0_9 = arith.constant 0 : index
    %10 = vector.load %arg4[%c0_8, %c0_9] : memref<1x128xf32, #tpu.memory_space<vmem>>, vector<1x128xf32>
    %11 = vector.broadcast %10 : vector<1x128xf32> to vector<8x128xf32>
    %12 = arith.addf %9, %11 : vector<8x128xf32>
    %c0_10 = arith.constant 0 : index
    %c0_11 = arith.constant 0 : index
    %13 = vector.load %arg5[%c0_10, %c0_11] : memref<8x128xf32, #tpu.memory_space<vmem>>, vector<8x128xf32>
    tpu.vector_store %arg5[%c0_10, %c0_11], %12 {strides = array<i32>} : memref<8x128xf32, #tpu.memory_space<vmem>>, vector<8x128xf32>,
    return
  }
}

</mosaic_0001>

<llo_original>
// kernel: kobert_classifier_forward.12
$region0: #{kobert_classifier_forward.12}
  #allocation0 [shape = 'u32[]', space=smem, size = 0x4, offset = 0x4, fixed_abs, tag = 'smem constant byte address 0x4 - core index']
  #allocation1 [shape = 'u32[144,128]{1,0:T(1,128)}', space=vmem, size = 0x12000, scoped, tag = 'internal scratch']
  %s0 = inlined_call_operand.vmem [shape: f32[16,128], index: 0, kind: input, shape index: {}]
  %s1 = inlined_call_operand.vmem [shape: f32[1,128], index: 1, kind: input, shape index: {}]
  %s2 = inlined_call_operand.vmem [shape: f32[1,128], index: 2, kind: input, shape index: {}]
  %s3 = inlined_call_operand.vmem [shape: bf16[16,128], index: 3, kind: output, shape index: {}]
  %s4 = sld [smem:[#allocation0]]
  $region22: #{kobert_classifier_forward.12} parent=0
    _
  %s6 = ssub.s32 1, %s4
  %s7 = scalar_select 0, %s6, %s4
  // Predicated region
  $region2: #{kobert_classifier_forward.12} parent=0 // pred_check
    _
  $region3: #{kobert_classifier_forward.12} parent=0 // pred_check_branch
    %9 = sbr.rel (0) target = $region5
  $region4: #{kobert_classifier_forward.12} parent=0 // pred_region
    _
  $region5: #{kobert_classifier_forward.12} parent=0 // pred_fallthru
    _
  // Predicated region
  $region6: #{kobert_classifier_forward.12} parent=0 // pred_check
    _
  $region7: #{kobert_classifier_forward.12} parent=0 // pred_check_branch
    %11 = sbr.rel (0) target = $region9
  $region8: #{kobert_classifier_forward.12} parent=0 // pred_region
    _
  $region9: #{kobert_classifier_forward.12} parent=0 // pred_fallthru
    _
  // Predicated region
  $region10: #{kobert_classifier_forward.12} parent=0 // pred_check
    _
  $region11: #{kobert_classifier_forward.12} parent=0 // pred_check_branch
    %13 = sbr.rel (0) target = $region13
  $region12: #{kobert_classifier_forward.12} parent=0 // pred_region
    _
  $region13: #{kobert_classifier_forward.12} parent=0 // pred_fallthru
    _
  %v14 = vld [vmem:[%s0] sm:$0xff]
  %v15 = vld [vmem:[%s0 + $0x8] sm:$0xff]
  %16 = vadd.xlane.f32.xlu0 %v14
  %v17 = vpop.xlane.xlu0 %16
  %18 = vadd.xlane.f32.xlu0 %v15
  %v19 = vpop.xlane.xlu0 %18
  %v20 = vrcp.pop 128.0
  %v21 = vmul.f32 %v17, %v20
  %v22 = vmul.f32 %v19, %v20
  %v23 = vsub.f32 %v14, %v21
  %v24 = vsub.f32 %v15, %v22
  %v25 = vmul.f32 %v23, %v23
  %v26 = vmul.f32 %v24, %v24
  %27 = vadd.xlane.f32.xlu0 %v25
  %v28 = vpop.xlane.xlu0 %27
  %29 = vadd.xlane.f32.xlu0 %v26
  %v30 = vpop.xlane.xlu0 %29
  %v31 = vmul.f32 %v28, %v20
  %v32 = vmul.f32 %v30, %v20
  %v33 = vadd.f32 %v31, 1e-12
  %v34 = vadd.f32 %v32, 1e-12
  %v35 = vrsqrt.pop %v33
  %v36 = vrsqrt.pop %v34
  %v37 = vmul.f32 %v23, %v35
  %v38 = vmul.f32 %v24, %v36
  %v39 = vld [vmem:[%s1] sm:$0x1]
  %v41 = vlaneseq
  %v42 = vshrl.u32 %v41, 7
  %v43 = vsub.s32 0, %v42
  %v44 = vrot.slane %v39, %v43
  %v46 = vmul.f32 %v37, %v44
  %v47 = vmul.f32 %v38, %v44
  %v48 = vld [vmem:[%s2] sm:$0x1]
  %v50 = vlaneseq
  %v51 = vshrl.u32 %v50, 7
  %v52 = vsub.s32 0, %v51
  %v53 = vrot.slane %v48, %v52
  %v55 = vadd.f32 %v46, %v53
  %v56 = vadd.f32 %v47, %v53
  %v57 = vpack.c.bf16 %v56, %v55
  %v59 = vunpack.c.l.b16 %v57
  %v60 = vunpack.c.h.b16 %v57
  %v61 = vpack.c.b16 %v59, %v59
  %v62 = vpack.c.b16 %v60, %v60
  %65 = vst [vmem:[%s3] sm:$0xf] %v61
  %66 = vst [vmem:[%s3 + $0x4] sm:$0xf] %v62
  // Predicated region
  $region14: #{kobert_classifier_forward.12} parent=0 // pred_check
    _
  $region15: #{kobert_classifier_forward.12} parent=0 // pred_check_branch
    %68 = sbr.rel (0) target = $region17
  $region16: #{kobert_classifier_forward.12} parent=0 // pred_region
    _
  $region17: #{kobert_classifier_forward.12} parent=0 // pred_fallthru
    _
  // Predicated region
  $region18: #{kobert_classifier_forward.12} parent=0 // pred_check
    _
  $region19: #{kobert_classifier_forward.12} parent=0 // pred_check_branch
    %70 = sbr.rel (0) target = $region21
  $region20: #{kobert_classifier_forward.12} parent=0 // pred_region
    _
  $region21: #{kobert_classifier_forward.12} parent=0 // pred_fallthru
    _

// kernel: kobert_classifier_forward.15
$region0: #{kobert_classifier_forward.15}
  #allocation0 [shape = 'u32[]', space=smem, size = 0x4, offset = 0x4, fixed_abs, tag = 'smem constant byte address 0x4 - core index']
  #allocation1 [shape = 'u32[144,128]{1,0:T(1,128)}', space=vmem, size = 0x12000, scoped, tag = 'internal scratch']
  %s0 = inlined_call_operand.vmem [shape: bf16[16,128], index: 0, kind: input, shape index: {}]
  %s1 = inlined_call_operand.vmem [shape: bf16[128,128], index: 1, kind: input, shape index: {}]
  %s2 = inlined_call_operand.vmem [shape: f32[1,128], index: 2, kind: input, shape index: {}]
  %s3 = inlined_call_operand.vmem [shape: bf16[16,128], index: 3, kind: input, shape index: {}]
  %s4 = inlined_call_operand.vmem [shape: f32[1,128], index: 4, kind: input, shape index: {}]
  %s5 = inlined_call_operand.vmem [shape: f32[1,128], index: 5, kind: input, shape index: {}]
  %s6 = inlined_call_operand.vmem [shape: bf16[16,128], index: 6, kind: output, shape index: {}]
  %s7 = sld [smem:[#allocation0]]
  $region34: #{kobert_classifier_forward.15} parent=0
    _
  %s9 = ssub.s32 1, %s7
  %s10 = scalar_select 0, %s9, %s7
  // Predicated region
  $region2: #{kobert_classifier_forward.15} parent=0 // pred_check
    _
  $region3: #{kobert_classifier_forward.15} parent=0 // pred_check_branch
    %12 = sbr.rel (0) target = $region5
  $region4: #{kobert_classifier_forward.15} parent=0 // pred_region
    _
  $region5: #{kobert_classifier_forward.15} parent=0 // pred_fallthru
    _
  // Predicated region
  $region6: #{kobert_classifier_forward.15} parent=0 // pred_check
    _
  $region7: #{kobert_classifier_forward.15} parent=0 // pred_check_branch
    %14 = sbr.rel (0) target = $region9
  $region8: #{kobert_classifier_forward.15} parent=0 // pred_region
    _
  $region9: #{kobert_classifier_forward.15} parent=0 // pred_fallthru
    _
  // Predicated region
  $region10: #{kobert_classifier_forward.15} parent=0 // pred_check
    _
  $region11: #{kobert_classifier_forward.15} parent=0 // pred_check_branch
    %16 = sbr.rel (0) target = $region13
  $region12: #{kobert_classifier_forward.15} parent=0 // pred_region
    _
  $region13: #{kobert_classifier_forward.15} parent=0 // pred_fallthru
    _
  // Predicated region
  $region14: #{kobert_classifier_forward.15} parent=0 // pred_check
    _
  $region15: #{kobert_classifier_forward.15} parent=0 // pred_check_branch
    %18 = sbr.rel (0) target = $region17
  $region16: #{kobert_classifier_forward.15} parent=0 // pred_region
    _
  $region17: #{kobert_classifier_forward.15} parent=0 // pred_fallthru
    _
  // Predicated region
  $region18: #{kobert_classifier_forward.15} parent=0 // pred_check
    _
  $region19: #{kobert_classifier_forward.15} parent=0 // pred_check_branch
    %20 = sbr.rel (0) target = $region21
  $region20: #{kobert_classifier_forward.15} parent=0 // pred_region
    _
  $region21: #{kobert_classifier_forward.15} parent=0 // pred_fallthru
    _
  // Predicated region
  $region22: #{kobert_classifier_forward.15} parent=0 // pred_check
    _
  $region23: #{kobert_classifier_forward.15} parent=0 // pred_check_branch
    %22 = sbr.rel (0) target = $region25
  $region24: #{kobert_classifier_forward.15} parent=0 // pred_region
    _
  $region25: #{kobert_classifier_forward.15} parent=0 // pred_fallthru
    _
  %v24 = vld [vmem:[%s0] sm:$0xf]
  %v25 = vld [vmem:[%s0 + $0x4] sm:$0xf]
  %v26 = vld [vmem:[%s1] sm:$0xf]
  %v27 = vld [vmem:[%s1 + $0x4] sm:$0xf]
  %v28 = vld [vmem:[%s1 + $0x8] sm:$0xf]
  %v29 = vld [vmem:[%s1 + $0xc] sm:$0xf]
  %v30 = vld [vmem:[%s1 + $0x10] sm:$0xf]
  %v31 = vld [vmem:[%s1 + $0x14] sm:$0xf]
  %v32 = vld [vmem:[%s1 + $0x18] sm:$0xf]
  %v33 = vld [vmem:[%s1 + $0x1c] sm:$0xf]
  %v34 = vld [vmem:[%s1 + $0x20] sm:$0xf]
  %v35 = vld [vmem:[%s1 + $0x24] sm:$0xf]
  %v36 = vld [vmem:[%s1 + $0x28] sm:$0xf]
  %v37 = vld [vmem:[%s1 + $0x2c] sm:$0xf]
  %v38 = vld [vmem:[%s1 + $0x30] sm:$0xf]
  %v39 = vld [vmem:[%s1 + $0x34] sm:$0xf]
  %v40 = vld [vmem:[%s1 + $0x38] sm:$0xf]
  %v41 = vld [vmem:[%s1 + $0x3c] sm:$0xf]
  %v42 = vld [vmem:[%s2] sm:$0x1]
  %v44 = vlaneseq
  %v45 = vshrl.u32 %v44, 7
  %v46 = vsub.s32 0, %v45
  %v47 = vrot.slane %v42, %v46
  %v51 = vunpack.c.l.b16 %v24
  %v52 = vunpack.c.l.b16 %v25
  %v53 = vpack.c.b16 %v52, %v51
  %v71 = vunpack.c.l.b16 %v26
  %v72 = vunpack.c.l.b16 %v27
  %v73 = vunpack.c.l.b16 %v28
  %v74 = vunpack.c.l.b16 %v29
  %v75 = vunpack.c.l.b16 %v30
  %v76 = vunpack.c.l.b16 %v31
  %v77 = vunpack.c.l.b16 %v32
  %v78 = vunpack.c.l.b16 %v33
  %v79 = vunpack.c.l.b16 %v34
  %v80 = vunpack.c.l.b16 %v35
  %v81 = vunpack.c.l.b16 %v36
  %v82 = vunpack.c.l.b16 %v37
  %v83 = vunpack.c.l.b16 %v38
  %v84 = vunpack.c.l.b16 %v39
  %v85 = vunpack.c.l.b16 %v40
  %v86 = vunpack.c.l.b16 %v41
  %v87 = vpack.c.b16 %v72, %v71
  %v88 = vpack.c.b16 %v74, %v73
  %v89 = vpack.c.b16 %v76, %v75
  %v90 = vpack.c.b16 %v78, %v77
  %v91 = vpack.c.b16 %v80, %v79
  %v92 = vpack.c.b16 %v82, %v81
  %v93 = vpack.c.b16 %v84, %v83
  %v94 = vpack.c.b16 %v86, %v85
  %103 = vmatprep.subr.bf16.mxu0 0
  %104 = vmatpush1.bf16.msra.mxu0 %v87
  %105 = vmatprep.subr.bf16.mxu0 0
  %106 = vmatpush1.bf16.msra.mxu0 %v88
  %107 = vmatprep.subr.bf16.mxu0 0
  %108 = vmatpush1.bf16.msra.mxu0 %v89
  %109 = vmatprep.subr.bf16.mxu0 0
  %110 = vmatpush1.bf16.msra.mxu0 %v90
  %111 = vmatprep.subr.bf16.mxu0 0
  %112 = vmatpush1.bf16.msra.mxu0 %v91
  %113 = vmatprep.subr.bf16.mxu0 0
  %114 = vmatpush1.bf16.msra.mxu0 %v92
  %115 = vmatprep.subr.bf16.mxu0 0
  %116 = vmatpush1.bf16.msra.mxu0 %v93
  %117 = vmatprep.subr.bf16.mxu0 0
  %118 = vmatpush1.bf16.msra.mxu0 %v94
  %119 = vmatprep.subr.bf16.mxu0 0
  %120 = vmatpush1.bf16.msra.mxu0 0
  %121 = vmatprep.subr.bf16.mxu0 0
  %122 = vmatpush1.bf16.msra.mxu0 0
  %123 = vmatprep.subr.bf16.mxu0 0
  %124 = vmatpush1.bf16.msra.mxu0 0
  %125 = vmatprep.subr.bf16.mxu0 0
  %126 = vmatpush1.bf16.msra.mxu0 0
  %127 = vmatprep.subr.bf16.mxu0 0
  %128 = vmatpush1.bf16.msra.mxu0 0
  %129 = vmatprep.subr.bf16.mxu0 0
  %130 = vmatpush1.bf16.msra.mxu0 0
  %131 = vmatprep.subr.bf16.mxu0 0
  %132 = vmatpush1.bf16.msra.mxu0 0
  %133 = vmatprep.subr.bf16.mxu0 0
  %134 = vmatpush1.bf16.msra.mxu0 0
  %135 = vmatprep.mubr.bf16.mxu0 0
  %136 = vmatmul.mubr.bf16.gmra.mrb[0].mxu0 %v53
  %v137 = vpop.f32.mrb[0].mxu0
  %v138 = vadd.f32 %v47, %v137
  %v139 = vpop.f32.mrb[0].mxu0
  %v140 = vpop.f32.mrb[0].mxu0
  %v141 = vadd.f32 %v47, %v140
  %v142 = vpop.f32.mrb[0].mxu0
  %143 = vdwg.mxu0
  %v144 = vld [vmem:[%s3] sm:$0xf]
  %v145 = vld [vmem:[%s3 + $0x4] sm:$0xf]
  %v146 = vunpack.c.l.bf16 %v144
  %v147 = vunpack.c.l.bf16 %v145
  %v148 = vadd.f32 %v138, %v146
  %v149 = vadd.f32 %v141, %v147
  %150 = vadd.xlane.f32.xlu0 %v148
  %v151 = vpop.xlane.xlu0 %150
  %152 = vadd.xlane.f32.xlu0 %v149
  %v153 = vpop.xlane.xlu0 %152
  %v154 = vrcp.pop 128.0
  %v155 = vmul.f32 %v151, %v154
  %v156 = vmul.f32 %v153, %v154
  %v157 = vsub.f32 %v148, %v155
  %v158 = vsub.f32 %v149, %v156
  %v159 = vmul.f32 %v157, %v157
  %v160 = vmul.f32 %v158, %v158
  %161 = vadd.xlane.f32.xlu0 %v159
  %v162 = vpop.xlane.xlu0 %161
  %163 = vadd.xlane.f32.xlu0 %v160
  %v164 = vpop.xlane.xlu0 %163
  %v165 = vmul.f32 %v162, %v154
  %v166 = vmul.f32 %v164, %v154
  %v167 = vadd.f32 %v165, 1e-12
  %v168 = vadd.f32 %v166, 1e-12
  %v169 = vrsqrt.pop %v167
  %v170 = vrsqrt.pop %v168
  %v171 = vmul.f32 %v157, %v169
  %v172 = vmul.f32 %v158, %v170
  %v173 = vld [vmem:[%s4] sm:$0x1]
  %v175 = vlaneseq
  %v176 = vshrl.u32 %v175, 7
  %v177 = vsub.s32 0, %v176
  %v178 = vrot.slane %v173, %v177
  %v180 = vmul.f32 %v171, %v178
  %v181 = vmul.f32 %v172, %v178
  %v182 = vld [vmem:[%s5] sm:$0x1]
  %v184 = vlaneseq
  %v185 = vshrl.u32 %v184, 7
  %v186 = vsub.s32 0, %v185
  %v187 = vrot.slane %v182, %v186
  %v189 = vadd.f32 %v180, %v187
  %v190 = vadd.f32 %v181, %v187
  %v191 = vpack.c.bf16 %v190, %v189
  %v193 = vunpack.c.l.b16 %v191
  %v194 = vunpack.c.h.b16 %v191
  %v195 = vpack.c.b16 %v193, %v193
  %v196 = vpack.c.b16 %v194, %v194
  %199 = vst [vmem:[%s6] sm:$0xf] %v195
  %200 = vst [vmem:[%s6 + $0x4] sm:$0xf] %v196
  // Predicated region
  $region26: #{kobert_classifier_forward.15} parent=0 // pred_check
    _
  $region27: #{kobert_classifier_forward.15} parent=0 // pred_check_branch
    %202 = sbr.rel (0) target = $region29
  $region28: #{kobert_classifier_forward.15} parent=0 // pred_region
    _
  $region29: #{kobert_classifier_forward.15} parent=0 // pred_fallthru
    _
  // Predicated region
  $region30: #{kobert_classifier_forward.15} parent=0 // pred_check
    _
  $region31: #{kobert_classifier_forward.15} parent=0 // pred_check_branch
    %204 = sbr.rel (0) target = $region33
  $region32: #{kobert_classifier_forward.15} parent=0 // pred_region
    _
  $region33: #{kobert_classifier_forward.15} parent=0 // pred_fallthru
    _

// kernel: kobert_classifier_forward.14
$region0: #{kobert_classifier_forward.14}
  #allocation0 [shape = 'u32[]', space=smem, size = 0x4, offset = 0x4, fixed_abs, tag = 'smem constant byte address 0x4 - core index']
  #allocation1 [shape = 'u32[144,128]{1,0:T(1,128)}', space=vmem, size = 0x12000, scoped, tag = 'internal scratch']
  %s0 = inlined_call_operand.vmem [shape: bf16[2,8,384], index: 0, kind: input, shape index: {}, may-alias: {0,1,2}]
  %s1 = inlined_call_operand.vmem [shape: bf16[2,8,384], index: 1, kind: input, shape index: {}, may-alias: {0,1,2}]
  %s2 = inlined_call_operand.vmem [shape: bf16[2,8,384], index: 2, kind: input, shape index: {}, may-alias: {0,1,2}]
  %s3 = inlined_call_operand.vmem [shape: f32[2,1,8], index: 3, kind: input, shape index: {}]
  %s4 = inlined_call_operand.vmem [shape: bf16[2,8,128], index: 4, kind: output, shape index: {}]
  %s5 = sld [smem:[#allocation0]]
  $region49: #{kobert_classifier_forward.14} parent=0
    _
  %s7 = ssub.s32 1, %s5
  %s8 = scalar_select 0, %s7, %s5
  loop: start=0, step=1, limit=4
  $region2: #{kobert_classifier_forward.14} parent=0 // loop_pre_header
    _
  $region3: #{kobert_classifier_forward.14} parent=0 // loop_header
    %s10 = sphi 0, %s14
    %p11 = scmp.ge.s32.totalorder %s10, 4
    %s17 = sphi 0, %s29
    %s18 = sphi 0, %s25
    %s19 = sphi 0, %s17
    %s20 = sphi 0, %s18
    %s21 = sphi 0, %s19
    %s22 = sphi 0, %s20
    %s34 = sphi 0, %s36
    %s37 = sphi 0, %s34
    %s38 = sphi 0, %s37
    %s54 = sphi 0, %s38
    %s64 = sphi 0, %s66
    %s67 = sphi 0, %s64
    %s68 = sphi 0, %s67
    %s84 = sphi 0, %s68
    %s94 = sphi 0, %s96
    %s97 = sphi 0, %s94
    %s98 = sphi 0, %s97
    %s114 = sphi 0, %s98
    %s120 = sphi 0, %s122
    %s123 = sphi 0, %s120
    %s124 = sphi 0, %s123
    %s140 = sphi 0, %s124
    %s148 = sphi 0, %s150
    %s151 = sphi 0, %s148
    %s152 = sphi 0, %s151
    %s168 = sphi 0, %s152
  $region4: #{kobert_classifier_forward.14} parent=0 // loop_header_branch
    %13 = sbr.rel (%p11) target = $region8
  $region5: #{kobert_classifier_forward.14} parent=0 // loop_body
    %s15 = ssub.s32 %s10, 1
    %s16 = ssub.s32 %s10, 2
    %s23 = sadd.s32 1, %s18
    %p24 = scmp.ge.s32.totalorder %s23, 1
    %s25 = scalar_select %p24, 0, %s23
    %s26 = sadd.s32 1, %s17
    %s27 = scalar_select %p24, %s26, %s17
    %p28 = scmp.ge.s32.totalorder %s27, 2
    %s29 = scalar_select %p28, 0, %s27
    %s30 = ssub.s32 %s17, %s29
    %s31 = ssub.s32 %s18, %s25
    %s32 = sor.u32 %s30, %s31
    %p33 = scmp.eq.s32.totalorder %s32, 0
    %s35 = sadd.s32 %s34, 1
    %s36 = scalar_select %p33, %s34, %s35
    %p39 = pneg %p33
    %p40 = scmp.eq.s32.totalorder %s10, 1
    %p41 = por %p39, %p40
    %p42 = scmp.ne.s32.totalorder %s34, %s37
    %p43 = scmp.eq.s32.totalorder %s10, 0
    %p44 = por %p42, %p43
    %p45 = scmp.ne.s32.totalorder %s34, %s37
    %p46 = scmp.eq.s32.totalorder %s15, 1
    %p47 = por %p45, %p46
    %p48 = scmp.ne.s32.totalorder %s37, %s38
    %p49 = scmp.eq.s32.totalorder %s15, 0
    %p50 = por %p48, %p49
    %p51 = scmp.ne.s32.totalorder %s37, %s38
    %p52 = scmp.eq.s32.totalorder %s16, 1
    %p53 = por %p51, %p52
    %p55 = scmp.ne.s32.totalorder %s38, %s54
    %p56 = scmp.eq.s32.totalorder %s16, 0
    %p57 = por %p55, %p56
    %s58 = sadd.s32 %s18, 1
    %s59 = sadd.s32 %s25, 1
    %s60 = ssub.s32 %s17, %s29
    %s61 = ssub.s32 %s58, %s59
    %s62 = sor.u32 %s60, %s61
    %p63 = scmp.eq.s32.totalorder %s62, 0
    %s65 = sadd.s32 %s64, 1
    %s66 = scalar_select %p63, %s64, %s65
    %p69 = pneg %p63
    %p70 = scmp.eq.s32.totalorder %s10, 1
    %p71 = por %p69, %p70
    %p72 = scmp.ne.s32.totalorder %s64, %s67
    %p73 = scmp.eq.s32.totalorder %s10, 0
    %p74 = por %p72, %p73
    %p75 = scmp.ne.s32.totalorder %s64, %s67
    %p76 = scmp.eq.s32.totalorder %s15, 1
    %p77 = por %p75, %p76
    %p78 = scmp.ne.s32.totalorder %s67, %s68
    %p79 = scmp.eq.s32.totalorder %s15, 0
    %p80 = por %p78, %p79
    %p81 = scmp.ne.s32.totalorder %s67, %s68
    %p82 = scmp.eq.s32.totalorder %s16, 1
    %p83 = por %p81, %p82
    %p85 = scmp.ne.s32.totalorder %s68, %s84
    %p86 = scmp.eq.s32.totalorder %s16, 0
    %p87 = por %p85, %p86
    %s88 = sadd.s32 %s18, 2
    %s89 = sadd.s32 %s25, 2
    %s90 = ssub.s32 %s17, %s29
    %s91 = ssub.s32 %s88, %s89
    %s92 = sor.u32 %s90, %s91
    %p93 = scmp.eq.s32.totalorder %s92, 0
    %s95 = sadd.s32 %s94, 1
    %s96 = scalar_select %p93, %s94, %s95
    %p99 = pneg %p93
    %p100 = scmp.eq.s32.totalorder %s10, 1
    %p101 = por %p99, %p100
    %p102 = scmp.ne.s32.totalorder %s94, %s97
    %p103 = scmp.eq.s32.totalorder %s10, 0
    %p104 = por %p102, %p103
    %p105 = scmp.ne.s32.totalorder %s94, %s97
    %p106 = scmp.eq.s32.totalorder %s15, 1
    %p107 = por %p105, %p106
    %p108 = scmp.ne.s32.totalorder %s97, %s98
    %p109 = scmp.eq.s32.totalorder %s15, 0
    %p110 = por %p108, %p109
    %p111 = scmp.ne.s32.totalorder %s97, %s98
    %p112 = scmp.eq.s32.totalorder %s16, 1
    %p113 = por %p111, %p112
    %p115 = scmp.ne.s32.totalorder %s98, %s114
    %p116 = scmp.eq.s32.totalorder %s16, 0
    %p117 = por %p115, %p116
    %s118 = ssub.s32 %s17, %s29
    %p119 = scmp.eq.s32.totalorder %s118, 0
    %s121 = sadd.s32 %s120, 1
    %s122 = scalar_select %p119, %s120, %s121
    %p125 = pneg %p119
    %p126 = scmp.eq.s32.totalorder %s10, 1
    %p127 = por %p125, %p126
    %p128 = scmp.ne.s32.totalorder %s120, %s123
    %p129 = scmp.eq.s32.totalorder %s10, 0
    %p130 = por %p128, %p129
    %p131 = scmp.ne.s32.totalorder %s120, %s123
    %p132 = scmp.eq.s32.totalorder %s15, 1
    %p133 = por %p131, %p132
    %p134 = scmp.ne.s32.totalorder %s123, %s124
    %p135 = scmp.eq.s32.totalorder %s15, 0
    %p136 = por %p134, %p135
    %p137 = scmp.ne.s32.totalorder %s123, %s124
    %p138 = scmp.eq.s32.totalorder %s16, 1
    %p139 = por %p137, %p138
    %p141 = scmp.ne.s32.totalorder %s124, %s140
    %p142 = scmp.eq.s32.totalorder %s16, 0
    %p143 = por %p141, %p142
    %s144 = ssub.s32 %s17, %s29
    %s145 = ssub.s32 %s18, %s25
    %s146 = sor.u32 %s144, %s145
    %p147 = scmp.eq.s32.totalorder %s146, 0
    %s149 = sadd.s32 %s148, 1
    %s150 = scalar_select %p147, %s148, %s149
    %p153 = pneg %p147
    %p154 = scmp.eq.s32.totalorder %s10, 1
    %p155 = por %p153, %p154
    %p156 = scmp.ne.s32.totalorder %s148, %s151
    %p157 = scmp.eq.s32.totalorder %s10, 0
    %p158 = por %p156, %p157
    %p159 = scmp.ne.s32.totalorder %s148, %s151
    %p160 = scmp.eq.s32.totalorder %s15, 1
    %p161 = por %p159, %p160
    %p162 = scmp.ne.s32.totalorder %s151, %s152
    %p163 = scmp.eq.s32.totalorder %s15, 0
    %p164 = por %p162, %p163
    %p165 = scmp.ne.s32.totalorder %s151, %s152
    %p166 = scmp.eq.s32.totalorder %s16, 1
    %p167 = por %p165, %p166
    %p169 = scmp.ne.s32.totalorder %s152, %s168
    %p170 = scmp.eq.s32.totalorder %s16, 0
    %p171 = por %p169, %p170
    %p172 = scmp.le.s32.totalorder 1, %s10
    %p173 = scmp.lt.s32.totalorder %s10, 3
    %p174 = pnand %p172, %p173
    %p175 = pneg %p174
    // Predicated region
    $region9: #{kobert_classifier_forward.14} parent=5 // pred_check
      _
    $region10: #{kobert_classifier_forward.14} parent=5 // pred_check_branch
      %177 = sbr.rel (%p174) target = $region12
    $region11: #{kobert_classifier_forward.14} parent=5 // pred_region
      %s178 = ssub.s32 %s10, 1
    $region12: #{kobert_classifier_forward.14} parent=5 // pred_fallthru
      _
    %p179 = scmp.lt.s32.totalorder %s10, 2
    // Predicated region
    $region13: #{kobert_classifier_forward.14} parent=5 // pred_check
      %p180 = pneg %p179
    $region14: #{kobert_classifier_forward.14} parent=5 // pred_check_branch
      %182 = sbr.rel (%p180) target = $region16
    $region15: #{kobert_classifier_forward.14} parent=5 // pred_region
      // Predicated region
      $region17: #{kobert_classifier_forward.14} parent=15 // pred_check
        %p183 = pneg %p44
      $region18: #{kobert_classifier_forward.14} parent=15 // pred_check_branch
        %185 = sbr.rel (%p183) target = $region20
      $region19: #{kobert_classifier_forward.14} parent=15 // pred_region
        %p186 = scmp.lt.s32.totalorder %s17, 1
        %s187 = scalar_select %p186, %s17, 1
        %p188 = scmp.lt.s32.totalorder %s18, 2
        %s189 = scalar_select %p188, %s18, 2
        %s190 = smul.addr %s187, 3
        %s191 = sadd.s32 %s189, %s190
        %s192 = smul.addr %s191, 4
        %s193 = scalar_lea.vmem %s0, %s192
      $region20: #{kobert_classifier_forward.14} parent=15 // pred_fallthru
        _
      // Predicated region
      $region21: #{kobert_classifier_forward.14} parent=15 // pred_check
        %p194 = pneg %p74
      $region22: #{kobert_classifier_forward.14} parent=15 // pred_check_branch
        %196 = sbr.rel (%p194) target = $region24
      $region23: #{kobert_classifier_forward.14} parent=15 // pred_region
        %s197 = sadd.s32 %s18, 1
        %p198 = scmp.lt.s32.totalorder %s17, 1
        %s199 = scalar_select %p198, %s17, 1
        %p200 = scmp.lt.s32.totalorder %s197, 2
        %s201 = scalar_select %p200, %s197, 2
        %s202 = smul.addr %s199, 3
        %s203 = sadd.s32 %s201, %s202
        %s204 = smul.addr %s203, 4
        %s205 = scalar_lea.vmem %s1, %s204
        %s206 = sadd.s32 %s18, 1
      $region24: #{kobert_classifier_forward.14} parent=15 // pred_fallthru
        _
      // Predicated region
      $region25: #{kobert_classifier_forward.14} parent=15 // pred_check
        %p207 = pneg %p104
      $region26: #{kobert_classifier_forward.14} parent=15 // pred_check_branch
        %209 = sbr.rel (%p207) target = $region28
      $region27: #{kobert_classifier_forward.14} parent=15 // pred_region
        %s210 = sadd.s32 %s18, 2
        %p211 = scmp.lt.s32.totalorder %s17, 1
        %s212 = scalar_select %p211, %s17, 1
        %p213 = scmp.lt.s32.totalorder %s210, 2
        %s214 = scalar_select %p213, %s210, 2
        %s215 = smul.addr %s212, 3
        %s216 = sadd.s32 %s214, %s215
        %s217 = smul.addr %s216, 4
        %s218 = scalar_lea.vmem %s2, %s217
        %s219 = sadd.s32 %s18, 2
      $region28: #{kobert_classifier_forward.14} parent=15 // pred_fallthru
        _
      // Predicated region
      $region29: #{kobert_classifier_forward.14} parent=15 // pred_check
        %p220 = pneg %p130
      $region30: #{kobert_classifier_forward.14} parent=15 // pred_check_branch
        %222 = sbr.rel (%p220) target = $region32
      $region31: #{kobert_classifier_forward.14} parent=15 // pred_region
        %p223 = scmp.lt.s32.totalorder %s17, 1
        %s224 = scalar_select %p223, %s17, 1
        %s225 = scalar_lea.vmem %s3, %s224
      $region32: #{kobert_classifier_forward.14} parent=15 // pred_fallthru
        _
    $region16: #{kobert_classifier_forward.14} parent=5 // pred_fallthru
      _
    %p226 = scmp.le.s32.totalorder 1, %s10
    %p227 = scmp.lt.s32.totalorder %s10, 3
    %p228 = pnand %p226, %p227
    %p229 = pneg %p228
    // Predicated region
    $region33: #{kobert_classifier_forward.14} parent=5 // pred_check
      _
    $region34: #{kobert_classifier_forward.14} parent=5 // pred_check_branch
      %231 = sbr.rel (%p228) target = $region36
    $region35: #{kobert_classifier_forward.14} parent=5 // pred_region
      %s232 = ssub.s32 %s10, 1
      %p233 = scmp.lt.s32.totalorder %s19, 1
      %s234 = scalar_select %p233, %s19, 1
      %p235 = scmp.lt.s32.totalorder %s20, 2
      %s236 = scalar_select %p235, %s20, 2
      %s237 = smul.addr %s234, 3
      %s238 = sadd.s32 %s236, %s237
      %s239 = smul.addr %s238, 4
      %s240 = scalar_lea.vmem %s0, %s239
      %p241 = pneg %p50
      %p242 = pneg %p47
      %s243 = sadd.s32 %s20, 1
      %p244 = scmp.lt.s32.totalorder %s19, 1
      %s245 = scalar_select %p244, %s19, 1
      %p246 = scmp.lt.s32.totalorder %s243, 2
      %s247 = scalar_select %p246, %s243, 2
      %s248 = smul.addr %s245, 3
      %s249 = sadd.s32 %s247, %s248
      %s250 = smul.addr %s249, 4
      %s251 = scalar_lea.vmem %s1, %s250
      %p252 = pneg %p80
      %p253 = pneg %p77
      %s254 = sadd.s32 %s20, 2
      %p255 = scmp.lt.s32.totalorder %s19, 1
      %s256 = scalar_select %p255, %s19, 1
      %p257 = scmp.lt.s32.totalorder %s254, 2
      %s258 = scalar_select %p257, %s254, 2
      %s259 = smul.addr %s256, 3
      %s260 = sadd.s32 %s258, %s259
      %s261 = smul.addr %s260, 4
      %s262 = scalar_lea.vmem %s2, %s261
      %p263 = pneg %p110
      %p264 = pneg %p107
      %p265 = scmp.lt.s32.totalorder %s19, 1
      %s266 = scalar_select %p265, %s19, 1
      %s267 = scalar_lea.vmem %s3, %s266
      %p268 = pneg %p136
      %p269 = pneg %p133
      %p270 = pneg %p164
      %p271 = pneg %p161
      %p272 = scmp.lt.s32.totalorder %s19, 1
      %s273 = scalar_select %p272, %s19, 1
      %p274 = scmp.lt.s32.totalorder %s20, 0
      %s275 = scalar_select %p274, %s20, 0
      %s276 = sadd.s32 %s275, %s273
      %s277 = smul.addr %s276, 4
      %s278 = scalar_lea.vmem %s4, %s277
      %p279 = scmp.lt.s32.totalorder %s19, 1
      %s280 = scalar_select %p279, %s19, 1
      %p281 = scmp.lt.s32.totalorder %s20, 2
      %s282 = scalar_select %p281, %s20, 2
      %s283 = smul.addr %s280, 3
      %s284 = sadd.s32 %s282, %s283
      %s285 = smul.addr %s284, 4
      %s286 = scalar_lea.vmem %s0, %s285
      %s287 = sadd.s32 %s20, 1
      %p288 = scmp.lt.s32.totalorder %s19, 1
      %s289 = scalar_select %p288, %s19, 1
      %p290 = scmp.lt.s32.totalorder %s287, 2
      %s291 = scalar_select %p290, %s287, 2
      %s292 = smul.addr %s289, 3
      %s293 = sadd.s32 %s291, %s292
      %s294 = smul.addr %s293, 4
      %s295 = scalar_lea.vmem %s1, %s294
      %s296 = sadd.s32 %s20, 1
      %s297 = sadd.s32 %s20, 2
      %p298 = scmp.lt.s32.totalorder %s19, 1
      %s299 = scalar_select %p298, %s19, 1
      %p300 = scmp.lt.s32.totalorder %s297, 2
      %s301 = scalar_select %p300, %s297, 2
      %s302 = smul.addr %s299, 3
      %s303 = sadd.s32 %s301, %s302
      %s304 = smul.addr %s303, 4
      %s305 = scalar_lea.vmem %s2, %s304
      %s306 = sadd.s32 %s20, 2
      %p307 = scmp.lt.s32.totalorder %s19, 1
      %s308 = scalar_select %p307, %s19, 1
      %s309 = scalar_lea.vmem %s3, %s308
      %p310 = scmp.lt.s32.totalorder %s19, 1
      %s311 = scalar_select %p310, %s19, 1
      %p312 = scmp.lt.s32.totalorder %s20, 0
      %s313 = scalar_select %p312, %s20, 0
      %s314 = sadd.s32 %s313, %s311
      %s315 = smul.addr %s314, 4
      %s316 = scalar_lea.vmem %s4, %s315
      %v318 = vld [vmem:[%s309] sm:$0x1]
      %v319 = vld [vmem:[%s286] sm:$0xf]
      %v320 = vld [vmem:[%s295] sm:$0xf]
      %v321 = vld [vmem:[%s305] sm:$0xf]
      %vm322 = vcmask 523264
      %v324 = vsel %vm322, %v319, 0
      %v327 = vsel %vm322, %v320, 0
      %329 = vmatprep.subr.bf16.mxu0 0
      %330 = vmatpush1.bf16.xpose.msra.mxu0 %v327
      %331 = vmatprep.subr.bf16.mxu0 0
      %332 = vmatpush1.bf16.xpose.msra.mxu0 0
      %333 = vmatprep.subr.bf16.mxu0 0
      %334 = vmatpush1.bf16.xpose.msra.mxu0 0
      %335 = vmatprep.subr.bf16.mxu0 0
      %336 = vmatpush1.bf16.xpose.msra.mxu0 0
      %337 = vmatprep.subr.bf16.mxu0 0
      %338 = vmatpush1.bf16.xpose.msra.mxu0 0
      %339 = vmatprep.subr.bf16.mxu0 0
      %340 = vmatpush1.bf16.xpose.msra.mxu0 0
      %341 = vmatprep.subr.bf16.mxu0 0
      %342 = vmatpush1.bf16.xpose.msra.mxu0 0
      %343 = vmatprep.subr.bf16.mxu0 0
      %344 = vmatpush1.bf16.xpose.msra.mxu0 0
      %345 = vmatprep.subr.bf16.mxu0 0
      %346 = vmatpush1.bf16.xpose.msra.mxu0 0
      %347 = vmatprep.subr.bf16.mxu0 0
      %348 = vmatpush1.bf16.xpose.msra.mxu0 0
      %349 = vmatprep.subr.bf16.mxu0 0
      %350 = vmatpush1.bf16.xpose.msra.mxu0 0
      %351 = vmatprep.subr.bf16.mxu0 0
      %352 = vmatpush1.bf16.xpose.msra.mxu0 0
      %353 = vmatprep.subr.bf16.mxu0 0
      %354 = vmatpush1.bf16.xpose.msra.mxu0 0
      %355 = vmatprep.subr.bf16.mxu0 0
      %356 = vmatpush1.bf16.xpose.msra.mxu0 0
      %357 = vmatprep.subr.bf16.mxu0 0
      %358 = vmatpush1.bf16.xpose.msra.mxu0 0
      %359 = vmatprep.subr.bf16.mxu0 0
      %360 = vmatpush1.bf16.xpose.msra.mxu0 0
      %361 = vmatprep.mubr.bf16.mxu0 0
      %362 = vmatmul.mubr.bf16.gmra.mrb[0].mxu0 %v324
      %v363 = vpop.f32.mrb[0].mxu0
      %v364 = vadd.f32 0.0, %v363
      %v365 = vpop.f32.mrb[0].mxu0
      %v366 = vpop.f32.mrb[0].mxu0
      %v367 = vpop.f32.mrb[0].mxu0
      %368 = vdwg.mxu0
      %v369 = vmul.f32 %v364, 0.125
      %v371 = vlaneseq
      %v372 = vshrl.u32 %v371, 7
      %v373 = vsub.s32 0, %v372
      %v374 = vrot.slane %v318, %v373
      %v376 = vadd.f32 %v369, %v374
      %vm377 = vcmask 64512
      %v378 = vsel %vm377, %v376, -inf
      %379 = vmax.xlane.f32.xlu0 %v378
      %v380 = vpop.xlane.xlu0 %379
      %v381 = vsub.f32 %v376, %v380
      %v382 = vmul.f32 %v381, 1.442695
      %v383 = vpow.pop %v382
      %v384 = vsel %vm377, %v383, 0.0
      %385 = vadd.xlane.f32.xlu0 %v384
      %v386 = vpop.xlane.xlu0 %385
      %v387 = vrcp.pop %v386
      %v388 = vmul.f32 %v383, %v387
      %v389 = vpack.c.bf16 %v388, %v388
      %v391 = vsel %vm377, %v389, 0
      %vm393 = vcmask 1043456
      %v395 = vsel %vm393, %v321, 0
      %397 = vmatprep.subr.bf16.mxu0 0
      %398 = vmatpush1.bf16.msra.mxu0 %v395
      %399 = vmatprep.subr.bf16.mxu0 0
      %400 = vmatpush1.bf16.msra.mxu0 0
      %401 = vmatprep.subr.bf16.mxu0 0
      %402 = vmatpush1.bf16.msra.mxu0 0
      %403 = vmatprep.subr.bf16.mxu0 0
      %404 = vmatpush1.bf16.msra.mxu0 0
      %405 = vmatprep.subr.bf16.mxu0 0
      %406 = vmatpush1.bf16.msra.mxu0 0
      %407 = vmatprep.subr.bf16.mxu0 0
      %408 = vmatpush1.bf16.msra.mxu0 0
      %409 = vmatprep.subr.bf16.mxu0 0
      %410 = vmatpush1.bf16.msra.mxu0 0
      %411 = vmatprep.subr.bf16.mxu0 0
      %412 = vmatpush1.bf16.msra.mxu0 0
      %413 = vmatprep.subr.bf16.mxu0 0
      %414 = vmatpush1.bf16.msra.mxu0 0
      %415 = vmatprep.subr.bf16.mxu0 0
      %416 = vmatpush1.bf16.msra.mxu0 0
      %417 = vmatprep.subr.bf16.mxu0 0
      %418 = vmatpush1.bf16.msra.mxu0 0
      %419 = vmatprep.subr.bf16.mxu0 0
      %420 = vmatpush1.bf16.msra.mxu0 0
      %421 = vmatprep.subr.bf16.mxu0 0
      %422 = vmatpush1.bf16.msra.mxu0 0
      %423 = vmatprep.subr.bf16.mxu0 0
      %424 = vmatpush1.bf16.msra.mxu0 0
      %425 = vmatprep.subr.bf16.mxu0 0
      %426 = vmatpush1.bf16.msra.mxu0 0
      %427 = vmatprep.subr.bf16.mxu0 0
      %428 = vmatpush1.bf16.msra.mxu0 0
      %429 = vmatprep.mubr.bf16.mxu0 0
      %430 = vmatmul.mubr.bf16.gmra.mrb[0].mxu0 %v391
      %v431 = vpop.f32.mrb[0].mxu0
      %v432 = vadd.f32 0.0, %v431
      %v433 = vpop.f32.mrb[0].mxu0
      %v434 = vpop.f32.mrb[0].mxu0
      %v435 = vpop.f32.mrb[0].mxu0
      %436 = vdwg.mxu0
      %v437 = vpack.c.bf16 %v432, %v432
      %vm438 = vcmask 519168
      %439 = vst.msk [vmem:[%s316] sm:$0xf] %vm438, %v437
      %v440 = vld [vmem:[%s286] sm:$0xf]
      %v441 = vld [vmem:[%s295] sm:$0xf]
      %v442 = vld [vmem:[%s305] sm:$0xf]
      %v444 = vunpack.c.l.b16 %v440
      %v445 = vpack.c.b16 %v444, %v444
      %446 = vrot.lane.b32.xlu0 %v445, 64
      %v447 = vpop.permute.xlu0 %446
      %v449 = vunpack.c.l.b16 %v441
      %v450 = vpack.c.b16 %v449, %v449
      %451 = vrot.lane.b32.xlu0 %v450, 64
      %v452 = vpop.permute.xlu0 %451
      %v454 = vsel %vm322, %v447, 0
      %v457 = vsel %vm322, %v452, 0
      %459 = vmatprep.subr.bf16.mxu0 0
      %460 = vmatpush1.bf16.xpose.msra.mxu0 %v457
      %461 = vmatprep.subr.bf16.mxu0 0
      %462 = vmatpush1.bf16.xpose.msra.mxu0 0
      %463 = vmatprep.subr.bf16.mxu0 0
      %464 = vmatpush1.bf16.xpose.msra.mxu0 0
      %465 = vmatprep.subr.bf16.mxu0 0
      %466 = vmatpush1.bf16.xpose.msra.mxu0 0
      %467 = vmatprep.subr.bf16.mxu0 0
      %468 = vmatpush1.bf16.xpose.msra.mxu0 0
      %469 = vmatprep.subr.bf16.mxu0 0
      %470 = vmatpush1.bf16.xpose.msra.mxu0 0
      %471 = vmatprep.subr.bf16.mxu0 0
      %472 = vmatpush1.bf16.xpose.msra.mxu0 0
      %473 = vmatprep.subr.bf16.mxu0 0
      %474 = vmatpush1.bf16.xpose.msra.mxu0 0
      %475 = vmatprep.subr.bf16.mxu0 0
      %476 = vmatpush1.bf16.xpose.msra.mxu0 0
      %477 = vmatprep.subr.bf16.mxu0 0
      %478 = vmatpush1.bf16.xpose.msra.mxu0 0
      %479 = vmatprep.subr.bf16.mxu0 0
      %480 = vmatpush1.bf16.xpose.msra.mxu0 0
      %481 = vmatprep.subr.bf16.mxu0 0
      %482 = vmatpush1.bf16.xpose.msra.mxu0 0
      %483 = vmatprep.subr.bf16.mxu0 0
      %484 = vmatpush1.bf16.xpose.msra.mxu0 0
      %485 = vmatprep.subr.bf16.mxu0 0
      %486 = vmatpush1.bf16.xpose.msra.mxu0 0
      %487 = vmatprep.subr.bf16.mxu0 0
      %488 = vmatpush1.bf16.xpose.msra.mxu0 0
      %489 = vmatprep.subr.bf16.mxu0 0
      %490 = vmatpush1.bf16.xpose.msra.mxu0 0
      %491 = vmatprep.mubr.bf16.mxu0 0
      %492 = vmatmul.mubr.bf16.gmra.mrb[0].mxu0 %v454
      %v493 = vpop.f32.mrb[0].mxu0
      %v494 = vadd.f32 0.0, %v493
      %v495 = vpop.f32.mrb[0].mxu0
      %v496 = vpop.f32.mrb[0].mxu0
      %v497 = vpop.f32.mrb[0].mxu0
      %498 = vdwg.mxu0
      %v499 = vmul.f32 %v494, 0.125
      %v500 = vadd.f32 %v499, %v374
      %v501 = vsel %vm377, %v500, -inf
      %502 = vmax.xlane.f32.xlu0 %v501
      %v503 = vpop.xlane.xlu0 %502
      %v504 = vsub.f32 %v500, %v503
      %v505 = vmul.f32 %v504, 1.442695
      %v506 = vpow.pop %v505
      %v507 = vsel %vm377, %v506, 0.0
      %508 = vadd.xlane.f32.xlu0 %v507
      %v509 = vpop.xlane.xlu0 %508
      %v510 = vrcp.pop %v509
      %v511 = vmul.f32 %v506, %v510
      %v512 = vpack.c.bf16 %v511, %v511
      %v514 = vunpack.c.l.b16 %v442
      %v515 = vpack.c.b16 %v514, %v514
      %516 = vrot.lane.b32.xlu0 %v515, 64
      %v517 = vpop.permute.xlu0 %516
      %v519 = vsel %vm377, %v512, 0
      %v522 = vsel %vm393, %v517, 0
      %524 = vmatprep.subr.bf16.mxu0 0
      %525 = vmatpush1.bf16.msra.mxu0 %v522
      %526 = vmatprep.subr.bf16.mxu0 0
      %527 = vmatpush1.bf16.msra.mxu0 0
      %528 = vmatprep.subr.bf16.mxu0 0
      %529 = vmatpush1.bf16.msra.mxu0 0
      %530 = vmatprep.subr.bf16.mxu0 0
      %531 = vmatpush1.bf16.msra.mxu0 0
      %532 = vmatprep.subr.bf16.mxu0 0
      %533 = vmatpush1.bf16.msra.mxu0 0
      %534 = vmatprep.subr.bf16.mxu0 0
      %535 = vmatpush1.bf16.msra.mxu0 0
      %536 = vmatprep.subr.bf16.mxu0 0
      %537 = vmatpush1.bf16.msra.mxu0 0
      %538 = vmatprep.subr.bf16.mxu0 0
      %539 = vmatpush1.bf16.msra.mxu0 0
      %540 = vmatprep.subr.bf16.mxu0 0
      %541 = vmatpush1.bf16.msra.mxu0 0
      %542 = vmatprep.subr.bf16.mxu0 0
      %543 = vmatpush1.bf16.msra.mxu0 0
      %544 = vmatprep.subr.bf16.mxu0 0
      %545 = vmatpush1.bf16.msra.mxu0 0
      %546 = vmatprep.subr.bf16.mxu0 0
      %547 = vmatpush1.bf16.msra.mxu0 0
      %548 = vmatprep.subr.bf16.mxu0 0
      %549 = vmatpush1.bf16.msra.mxu0 0
      %550 = vmatprep.subr.bf16.mxu0 0
      %551 = vmatpush1.bf16.msra.mxu0 0
      %552 = vmatprep.subr.bf16.mxu0 0
      %553 = vmatpush1.bf16.msra.mxu0 0
      %554 = vmatprep.subr.bf16.mxu0 0
      %555 = vmatpush1.bf16.msra.mxu0 0
      %556 = vmatprep.mubr.bf16.mxu0 0
      %557 = vmatmul.mubr.bf16.gmra.mrb[0].mxu0 %v519
      %v558 = vpop.f32.mrb[0].mxu0
      %v559 = vadd.f32 0.0, %v558
      %v560 = vpop.f32.mrb[0].mxu0
      %v561 = vpop.f32.mrb[0].mxu0
      %v562 = vpop.f32.mrb[0].mxu0
      %563 = vdwg.mxu0
      %v564 = vpack.c.bf16 %v559, %v559
      %v566 = vunpack.c.l.b16 %v564
      %v567 = vpack.c.b16 %v566, %v566
      %568 = vrot.lane.b32.xlu0 %v567, 64
      %v569 = vpop.permute.xlu0 %568
      %vm571 = vcmask 1043968
      %572 = vst.msk [vmem:[%s316] sm:$0xf] %vm571, %v569
      %p573 = scmp.lt.s32.totalorder %s19, 1
      %s574 = scalar_select %p573, %s19, 1
      %p575 = scmp.lt.s32.totalorder %s20, 0
      %s576 = scalar_select %p575, %s20, 0
      %s577 = sadd.s32 %s576, %s574
      %s578 = smul.addr %s577, 4
      %s579 = scalar_lea.vmem %s4, %s578
      // Predicated region
      $region37: #{kobert_classifier_forward.14} parent=35 // pred_check
        %p580 = pneg %p161
      $region38: #{kobert_classifier_forward.14} parent=35 // pred_check_branch
        %582 = sbr.rel (%p580) target = $region40
      $region39: #{kobert_classifier_forward.14} parent=35 // pred_region
        _
      $region40: #{kobert_classifier_forward.14} parent=35 // pred_fallthru
        _
    $region36: #{kobert_classifier_forward.14} parent=5 // pred_fallthru
      _
    %p583 = scmp.le.s32.totalorder 2, %s10
    // Predicated region
    $region41: #{kobert_classifier_forward.14} parent=5 // pred_check
      %p584 = pneg %p583
    $region42: #{kobert_classifier_forward.14} parent=5 // pred_check_branch
      %586 = sbr.rel (%p584) target = $region44
    $region43: #{kobert_classifier_forward.14} parent=5 // pred_region
      %s587 = ssub.s32 %s10, 2
      // Predicated region
      $region45: #{kobert_classifier_forward.14} parent=43 // pred_check
        %p588 = pneg %p167
      $region46: #{kobert_classifier_forward.14} parent=43 // pred_check_branch
        %590 = sbr.rel (%p588) target = $region48
      $region47: #{kobert_classifier_forward.14} parent=43 // pred_region
        %p591 = scmp.lt.s32.totalorder %s21, 1
        %s592 = scalar_select %p591, %s21, 1
        %p593 = scmp.lt.s32.totalorder %s22, 0
        %s594 = scalar_select %p593, %s22, 0
        %s595 = sadd.s32 %s594, %s592
        %s596 = smul.addr %s595, 4
        %s597 = scalar_lea.vmem %s4, %s596
      $region48: #{kobert_classifier_forward.14} parent=43 // pred_fallthru
        _
    $region44: #{kobert_classifier_forward.14} parent=5 // pred_fallthru
      _
  $region6: #{kobert_classifier_forward.14} parent=0 // loop_footer
    %s14 = sadd.s32 1, %s10
  $region7: #{kobert_classifier_forward.14} parent=0 // loop_footer_branch
    %9 = sbr.rel target = $region3
  $region8: #{kobert_classifier_forward.14} parent=0 // loop_exit
    _

// kernel: kobert_classifier_forward.13
$region0: #{kobert_classifier_forward.13}
  #allocation0 [shape = 'u32[]', space=smem, size = 0x4, offset = 0x4, fixed_abs, tag = 'smem constant byte address 0x4 - core index']
  #allocation1 [shape = 'u32[144,128]{1,0:T(1,128)}', space=vmem, size = 0x12000, scoped, tag = 'internal scratch']
  %s0 = inlined_call_operand.vmem [shape: bf16[16,128], index: 0, kind: input, shape index: {}]
  %s1 = inlined_call_operand.vmem [shape: bf16[128,384], index: 1, kind: input, shape index: {}]
  %s2 = inlined_call_operand.vmem [shape: f32[1,384], index: 2, kind: input, shape index: {}]
  %s3 = inlined_call_operand.vmem [shape: bf16[16,384], index: 3, kind: output, shape index: {}]
  %s4 = sld [smem:[#allocation0]]
  $region22: #{kobert_classifier_forward.13} parent=0
    _
  %s6 = ssub.s32 1, %s4
  %s7 = scalar_select 0, %s6, %s4
  // Predicated region
  $region2: #{kobert_classifier_forward.13} parent=0 // pred_check
    _
  $region3: #{kobert_classifier_forward.13} parent=0 // pred_check_branch
    %9 = sbr.rel (0) target = $region5
  $region4: #{kobert_classifier_forward.13} parent=0 // pred_region
    _
  $region5: #{kobert_classifier_forward.13} parent=0 // pred_fallthru
    _
  // Predicated region
  $region6: #{kobert_classifier_forward.13} parent=0 // pred_check
    _
  $region7: #{kobert_classifier_forward.13} parent=0 // pred_check_branch
    %11 = sbr.rel (0) target = $region9
  $region8: #{kobert_classifier_forward.13} parent=0 // pred_region
    _
  $region9: #{kobert_classifier_forward.13} parent=0 // pred_fallthru
    _
  // Predicated region
  $region10: #{kobert_classifier_forward.13} parent=0 // pred_check
    _
  $region11: #{kobert_classifier_forward.13} parent=0 // pred_check_branch
    %13 = sbr.rel (0) target = $region13
  $region12: #{kobert_classifier_forward.13} parent=0 // pred_region
    _
  $region13: #{kobert_classifier_forward.13} parent=0 // pred_fallthru
    _
  %v15 = vld [vmem:[%s0] sm:$0xf]
  %v16 = vld [vmem:[%s0 + $0x4] sm:$0xf]
  %v17 = vld [vmem:[%s1] sm:$0xff]
  %v18 = vld [vmem:[%s1 + $0x8] sm:$0xf]
  %v19 = vld [vmem:[%s1 + $0xc] sm:$0xff]
  %v20 = vld [vmem:[%s1 + $0x14] sm:$0xf]
  %v21 = vld [vmem:[%s1 + $0x18] sm:$0xff]
  %v22 = vld [vmem:[%s1 + $0x20] sm:$0xf]
  %v23 = vld [vmem:[%s1 + $0x24] sm:$0xff]
  %v24 = vld [vmem:[%s1 + $0x2c] sm:$0xf]
  %v25 = vld [vmem:[%s1 + $0x30] sm:$0xff]
  %v26 = vld [vmem:[%s1 + $0x38] sm:$0xf]
  %v27 = vld [vmem:[%s1 + $0x3c] sm:$0xff]
  %v28 = vld [vmem:[%s1 + $0x44] sm:$0xf]
  %v29 = vld [vmem:[%s1 + $0x48] sm:$0xff]
  %v30 = vld [vmem:[%s1 + $0x50] sm:$0xf]
  %v31 = vld [vmem:[%s1 + $0x54] sm:$0xff]
  %v32 = vld [vmem:[%s1 + $0x5c] sm:$0xf]
  %v33 = vld [vmem:[%s1 + $0x60] sm:$0xff]
  %v34 = vld [vmem:[%s1 + $0x68] sm:$0xf]
  %v35 = vld [vmem:[%s1 + $0x6c] sm:$0xff]
  %v36 = vld [vmem:[%s1 + $0x74] sm:$0xf]
  %v37 = vld [vmem:[%s1 + $0x78] sm:$0xff]
  %v38 = vld [vmem:[%s1 + $0x80] sm:$0xf]
  %v39 = vld [vmem:[%s1 + $0x84] sm:$0xff]
  %v40 = vld [vmem:[%s1 + $0x8c] sm:$0xf]
  %v41 = vld [vmem:[%s1 + $0x90] sm:$0xff]
  %v42 = vld [vmem:[%s1 + $0x98] sm:$0xf]
  %v43 = vld [vmem:[%s1 + $0x9c] sm:$0xff]
  %v44 = vld [vmem:[%s1 + $0xa4] sm:$0xf]
  %v45 = vld [vmem:[%s1 + $0xa8] sm:$0xff]
  %v46 = vld [vmem:[%s1 + $0xb0] sm:$0xf]
  %v47 = vld [vmem:[%s1 + $0xb4] sm:$0xff]
  %v48 = vld [vmem:[%s1 + $0xbc] sm:$0xf]
  %v49 = vld [vmem:[%s2] sm:$0x7]
  %v51 = vlaneseq
  %v52 = vshrl.u32 %v51, 7
  %v53 = vsub.s32 0, %v52
  %v54 = vrot.slane %v49, %v53
  %v55 = vlaneseq
  %v56 = vshrl.u32 %v55, 7
  %v57 = vsub.s32 1, %v56
  %v58 = vrot.slane %v49, %v57
  %v59 = vlaneseq
  %v60 = vshrl.u32 %v59, 7
  %v61 = vsub.s32 2, %v60
  %v62 = vrot.slane %v49, %v61
  %v68 = vunpack.c.l.b16 %v15
  %v69 = vunpack.c.l.b16 %v16
  %v70 = vpack.c.b16 %v69, %v68
  %v104 = vunpack.c.l.b16 %v17
  %v105 = vunpack.c.h.b16 %v17
  %v106 = vunpack.c.l.b16 %v18
  %v107 = vunpack.c.l.b16 %v19
  %v108 = vunpack.c.h.b16 %v19
  %v109 = vunpack.c.l.b16 %v20
  %v110 = vunpack.c.l.b16 %v21
  %v111 = vunpack.c.h.b16 %v21
  %v112 = vunpack.c.l.b16 %v22
  %v113 = vunpack.c.l.b16 %v23
  %v114 = vunpack.c.h.b16 %v23
  %v115 = vunpack.c.l.b16 %v24
  %v116 = vunpack.c.l.b16 %v25
  %v117 = vunpack.c.h.b16 %v25
  %v118 = vunpack.c.l.b16 %v26
  %v119 = vunpack.c.l.b16 %v27
  %v120 = vunpack.c.h.b16 %v27
  %v121 = vunpack.c.l.b16 %v28
  %v122 = vunpack.c.l.b16 %v29
  %v123 = vunpack.c.h.b16 %v29
  %v124 = vunpack.c.l.b16 %v30
  %v125 = vunpack.c.l.b16 %v31
  %v126 = vunpack.c.h.b16 %v31
  %v127 = vunpack.c.l.b16 %v32
  %v128 = vunpack.c.l.b16 %v33
  %v129 = vunpack.c.h.b16 %v33
  %v130 = vunpack.c.l.b16 %v34
  %v131 = vunpack.c.l.b16 %v35
  %v132 = vunpack.c.h.b16 %v35
  %v133 = vunpack.c.l.b16 %v36
  %v134 = vunpack.c.l.b16 %v37
  %v135 = vunpack.c.h.b16 %v37
  %v136 = vunpack.c.l.b16 %v38
  %v137 = vunpack.c.l.b16 %v39
  %v138 = vunpack.c.h.b16 %v39
  %v139 = vunpack.c.l.b16 %v40
  %v140 = vunpack.c.l.b16 %v41
  %v141 = vunpack.c.h.b16 %v41
  %v142 = vunpack.c.l.b16 %v42
  %v143 = vunpack.c.l.b16 %v43
  %v144 = vunpack.c.h.b16 %v43
  %v145 = vunpack.c.l.b16 %v44
  %v146 = vunpack.c.l.b16 %v45
  %v147 = vunpack.c.h.b16 %v45
  %v148 = vunpack.c.l.b16 %v46
  %v149 = vunpack.c.l.b16 %v47
  %v150 = vunpack.c.h.b16 %v47
  %v151 = vunpack.c.l.b16 %v48
  %v152 = vpack.c.b16 %v107, %v104
  %v153 = vpack.c.b16 %v108, %v105
  %v154 = vpack.c.b16 %v109, %v106
  %v155 = vpack.c.b16 %v113, %v110
  %v156 = vpack.c.b16 %v114, %v111
  %v157 = vpack.c.b16 %v115, %v112
  %v158 = vpack.c.b16 %v119, %v116
  %v159 = vpack.c.b16 %v120, %v117
  %v160 = vpack.c.b16 %v121, %v118
  %v161 = vpack.c.b16 %v125, %v122
  %v162 = vpack.c.b16 %v126, %v123
  %v163 = vpack.c.b16 %v127, %v124
  %v164 = vpack.c.b16 %v131, %v128
  %v165 = vpack.c.b16 %v132, %v129
  %v166 = vpack.c.b16 %v133, %v130
  %v167 = vpack.c.b16 %v137, %v134
  %v168 = vpack.c.b16 %v138, %v135
  %v169 = vpack.c.b16 %v139, %v136
  %v170 = vpack.c.b16 %v143, %v140
  %v171 = vpack.c.b16 %v144, %v141
  %v172 = vpack.c.b16 %v145, %v142
  %v173 = vpack.c.b16 %v149, %v146
  %v174 = vpack.c.b16 %v150, %v147
  %v175 = vpack.c.b16 %v151, %v148
  %200 = vmatprep.subr.bf16.mxu0 %v153
  %201 = vmatpush1.bf16.msra.mxu0 %v152
  %202 = vmatprep.subr.bf16.mxu0 %v156
  %203 = vmatpush1.bf16.msra.mxu0 %v155
  %204 = vmatprep.subr.bf16.mxu0 %v159
  %205 = vmatpush1.bf16.msra.mxu0 %v158
  %206 = vmatprep.subr.bf16.mxu0 %v162
  %207 = vmatpush1.bf16.msra.mxu0 %v161
  %208 = vmatprep.subr.bf16.mxu0 %v165
  %209 = vmatpush1.bf16.msra.mxu0 %v164
  %210 = vmatprep.subr.bf16.mxu0 %v168
  %211 = vmatpush1.bf16.msra.mxu0 %v167
  %212 = vmatprep.subr.bf16.mxu0 %v171
  %213 = vmatpush1.bf16.msra.mxu0 %v170
  %214 = vmatprep.subr.bf16.mxu0 %v174
  %215 = vmatpush1.bf16.msra.mxu0 %v173
  %216 = vmatprep.subr.bf16.mxu0 0
  %217 = vmatpush1.bf16.msra.mxu0 0
  %218 = vmatprep.subr.bf16.mxu0 0
  %219 = vmatpush1.bf16.msra.mxu0 0
  %220 = vmatprep.subr.bf16.mxu0 0
  %221 = vmatpush1.bf16.msra.mxu0 0
  %222 = vmatprep.subr.bf16.mxu0 0
  %223 = vmatpush1.bf16.msra.mxu0 0
  %224 = vmatprep.subr.bf16.mxu0 0
  %225 = vmatpush1.bf16.msra.mxu0 0
  %226 = vmatprep.subr.bf16.mxu0 0
  %227 = vmatpush1.bf16.msra.mxu0 0
  %228 = vmatprep.subr.bf16.mxu0 0
  %229 = vmatpush1.bf16.msra.mxu0 0
  %230 = vmatprep.subr.bf16.mxu0 0
  %231 = vmatpush1.bf16.msra.mxu0 0
  %232 = vmatprep.mubr.bf16.mxu0 0
  %233 = vmatmul.mubr.bf16.gmra.mrb[0].mxu0 %v70
  %v234 = vpop.f32.mrb[0].mxu0
  %v235 = vadd.f32 %v54, %v234
  %v236 = vpop.f32.mrb[0].mxu0
  %v237 = vadd.f32 %v58, %v236
  %v238 = vpop.f32.mrb[0].mxu0
  %v239 = vadd.f32 %v54, %v238
  %v240 = vpop.f32.mrb[0].mxu0
  %v241 = vadd.f32 %v58, %v240
  %242 = vdwg.mxu0
  %243 = vmatprep.subr.bf16.mxu0 0
  %244 = vmatpush1.bf16.msra.mxu0 %v154
  %245 = vmatprep.subr.bf16.mxu0 0
  %246 = vmatpush1.bf16.msra.mxu0 %v157
  %247 = vmatprep.subr.bf16.mxu0 0
  %248 = vmatpush1.bf16.msra.mxu0 %v160
  %249 = vmatprep.subr.bf16.mxu0 0
  %250 = vmatpush1.bf16.msra.mxu0 %v163
  %251 = vmatprep.subr.bf16.mxu0 0
  %252 = vmatpush1.bf16.msra.mxu0 %v166
  %253 = vmatprep.subr.bf16.mxu0 0
  %254 = vmatpush1.bf16.msra.mxu0 %v169
  %255 = vmatprep.subr.bf16.mxu0 0
  %256 = vmatpush1.bf16.msra.mxu0 %v172
  %257 = vmatprep.subr.bf16.mxu0 0
  %258 = vmatpush1.bf16.msra.mxu0 %v175
  %259 = vmatprep.subr.bf16.mxu0 0
  %260 = vmatpush1.bf16.msra.mxu0 0
  %261 = vmatprep.subr.bf16.mxu0 0
  %262 = vmatpush1.bf16.msra.mxu0 0
  %263 = vmatprep.subr.bf16.mxu0 0
  %264 = vmatpush1.bf16.msra.mxu0 0
  %265 = vmatprep.subr.bf16.mxu0 0
  %266 = vmatpush1.bf16.msra.mxu0 0
  %267 = vmatprep.subr.bf16.mxu0 0
  %268 = vmatpush1.bf16.msra.mxu0 0
  %269 = vmatprep.subr.bf16.mxu0 0
  %270 = vmatpush1.bf16.msra.mxu0 0
  %271 = vmatprep.subr.bf16.mxu0 0
  %272 = vmatpush1.bf16.msra.mxu0 0
  %273 = vmatprep.subr.bf16.mxu0 0
  %274 = vmatpush1.bf16.msra.mxu0 0
  %275 = vmatprep.mubr.bf16.mxu0 0
  %276 = vmatmul.mubr.bf16.gmra.mrb[0].mxu0 %v70
  %v277 = vpop.f32.mrb[0].mxu0
  %v278 = vadd.f32 %v62, %v277
  %v279 = vpop.f32.mrb[0].mxu0
  %v280 = vpop.f32.mrb[0].mxu0
  %v281 = vadd.f32 %v62, %v280
  %v282 = vpop.f32.mrb[0].mxu0
  %283 = vdwg.mxu0
  %v284 = vpack.c.bf16 %v239, %v235
  %v285 = vpack.c.bf16 %v241, %v237
  %v286 = vpack.c.bf16 %v281, %v278
  %v290 = vunpack.c.l.b16 %v284
  %v291 = vunpack.c.l.b16 %v285
  %v292 = vunpack.c.l.b16 %v286
  %v293 = vunpack.c.h.b16 %v284
  %v294 = vunpack.c.h.b16 %v285
  %v295 = vunpack.c.h.b16 %v286
  %v296 = vpack.c.b16 %v291, %v290
  %v297 = vpack.c.b16 %v292, %v292
  %v298 = vpack.c.b16 %v294, %v293
  %v299 = vpack.c.b16 %v295, %v295
  %304 = vst [vmem:[%s3] sm:$0xff] %v296
  %305 = vst [vmem:[%s3 + $0x8] sm:$0xf] %v297
  %306 = vst [vmem:[%s3 + $0xc] sm:$0xff] %v298
  %307 = vst [vmem:[%s3 + $0x14] sm:$0xf] %v299
  // Predicated region
  $region14: #{kobert_classifier_forward.13} parent=0 // pred_check
    _
  $region15: #{kobert_classifier_forward.13} parent=0 // pred_check_branch
    %309 = sbr.rel (0) target = $region17
  $region16: #{kobert_classifier_forward.13} parent=0 // pred_region
    _
  $region17: #{kobert_classifier_forward.13} parent=0 // pred_fallthru
    _
  // Predicated region
  $region18: #{kobert_classifier_forward.13} parent=0 // pred_check
    _
  $region19: #{kobert_classifier_forward.13} parent=0 // pred_check_branch
    %311 = sbr.rel (0) target = $region21
  $region20: #{kobert_classifier_forward.13} parent=0 // pred_region
    _
  $region21: #{kobert_classifier_forward.13} parent=0 // pred_fallthru
    _

// kernel: kobert_classifier_forward.16
$region0: #{kobert_classifier_forward.16}
  #allocation0 [shape = 'u32[]', space=smem, size = 0x4, offset = 0x4, fixed_abs, tag = 'smem constant byte address 0x4 - core index']
  #allocation1 [shape = 'u32[144,128]{1,0:T(1,128)}', space=vmem, size = 0x12000, scoped, tag = 'internal scratch']
  %s0 = inlined_call_operand.vmem [shape: bf16[16,128], index: 0, kind: input, shape index: {}]
  %s1 = inlined_call_operand.vmem [shape: bf16[128,512], index: 1, kind: input, shape index: {}]
  %s2 = inlined_call_operand.vmem [shape: f32[1,512], index: 2, kind: input, shape index: {}]
  %s3 = inlined_call_operand.vmem [shape: bf16[16,512], index: 3, kind: output, shape index: {}]
  %s4 = sld [smem:[#allocation0]]
  $region22: #{kobert_classifier_forward.16} parent=0
    _
  %s6 = ssub.s32 1, %s4
  %s7 = scalar_select 0, %s6, %s4
  // Predicated region
  $region2: #{kobert_classifier_forward.16} parent=0 // pred_check
    _
  $region3: #{kobert_classifier_forward.16} parent=0 // pred_check_branch
    %9 = sbr.rel (0) target = $region5
  $region4: #{kobert_classifier_forward.16} parent=0 // pred_region
    _
  $region5: #{kobert_classifier_forward.16} parent=0 // pred_fallthru
    _
  // Predicated region
  $region6: #{kobert_classifier_forward.16} parent=0 // pred_check
    _
  $region7: #{kobert_classifier_forward.16} parent=0 // pred_check_branch
    %11 = sbr.rel (0) target = $region9
  $region8: #{kobert_classifier_forward.16} parent=0 // pred_region
    _
  $region9: #{kobert_classifier_forward.16} parent=0 // pred_fallthru
    _
  // Predicated region
  $region10: #{kobert_classifier_forward.16} parent=0 // pred_check
    _
  $region11: #{kobert_classifier_forward.16} parent=0 // pred_check_branch
    %13 = sbr.rel (0) target = $region13
  $region12: #{kobert_classifier_forward.16} parent=0 // pred_region
    _
  $region13: #{kobert_classifier_forward.16} parent=0 // pred_fallthru
    _
  %v15 = vld [vmem:[%s0] sm:$0xf]
  %v16 = vld [vmem:[%s0 + $0x4] sm:$0xf]
  %v17 = vld [vmem:[%s1] sm:$0xff]
  %v18 = vld [vmem:[%s1 + $0x8] sm:$0xff]
  %v19 = vld [vmem:[%s1 + $0x10] sm:$0xff]
  %v20 = vld [vmem:[%s1 + $0x18] sm:$0xff]
  %v21 = vld [vmem:[%s1 + $0x20] sm:$0xff]
  %v22 = vld [vmem:[%s1 + $0x28] sm:$0xff]
  %v23 = vld [vmem:[%s1 + $0x30] sm:$0xff]
  %v24 = vld [vmem:[%s1 + $0x38] sm:$0xff]
  %v25 = vld [vmem:[%s1 + $0x40] sm:$0xff]
  %v26 = vld [vmem:[%s1 + $0x48] sm:$0xff]
  %v27 = vld [vmem:[%s1 + $0x50] sm:$0xff]
  %v28 = vld [vmem:[%s1 + $0x58] sm:$0xff]
  %v29 = vld [vmem:[%s1 + $0x60] sm:$0xff]
  %v30 = vld [vmem:[%s1 + $0x68] sm:$0xff]
  %v31 = vld [vmem:[%s1 + $0x70] sm:$0xff]
  %v32 = vld [vmem:[%s1 + $0x78] sm:$0xff]
  %v33 = vld [vmem:[%s1 + $0x80] sm:$0xff]
  %v34 = vld [vmem:[%s1 + $0x88] sm:$0xff]
  %v35 = vld [vmem:[%s1 + $0x90] sm:$0xff]
  %v36 = vld [vmem:[%s1 + $0x98] sm:$0xff]
  %v37 = vld [vmem:[%s1 + $0xa0] sm:$0xff]
  %v38 = vld [vmem:[%s1 + $0xa8] sm:$0xff]
  %v39 = vld [vmem:[%s1 + $0xb0] sm:$0xff]
  %v40 = vld [vmem:[%s1 + $0xb8] sm:$0xff]
  %v41 = vld [vmem:[%s1 + $0xc0] sm:$0xff]
  %v42 = vld [vmem:[%s1 + $0xc8] sm:$0xff]
  %v43 = vld [vmem:[%s1 + $0xd0] sm:$0xff]
  %v44 = vld [vmem:[%s1 + $0xd8] sm:$0xff]
  %v45 = vld [vmem:[%s1 + $0xe0] sm:$0xff]
  %v46 = vld [vmem:[%s1 + $0xe8] sm:$0xff]
  %v47 = vld [vmem:[%s1 + $0xf0] sm:$0xff]
  %v48 = vld [vmem:[%s1 + $0xf8] sm:$0xff]
  %v49 = vld [vmem:[%s2] sm:$0xf]
  %v51 = vlaneseq
  %v52 = vshrl.u32 %v51, 7
  %v53 = vsub.s32 0, %v52
  %v54 = vrot.slane %v49, %v53
  %v55 = vlaneseq
  %v56 = vshrl.u32 %v55, 7
  %v57 = vsub.s32 1, %v56
  %v58 = vrot.slane %v49, %v57
  %v59 = vlaneseq
  %v60 = vshrl.u32 %v59, 7
  %v61 = vsub.s32 2, %v60
  %v62 = vrot.slane %v49, %v61
  %v63 = vlaneseq
  %v64 = vshrl.u32 %v63, 7
  %v65 = vsub.s32 3, %v64
  %v66 = vrot.slane %v49, %v65
  %v73 = vunpack.c.l.b16 %v15
  %v74 = vunpack.c.l.b16 %v16
  %v75 = vpack.c.b16 %v74, %v73
  %v109 = vunpack.c.l.b16 %v17
  %v110 = vunpack.c.h.b16 %v17
  %v111 = vunpack.c.l.b16 %v18
  %v112 = vunpack.c.h.b16 %v18
  %v113 = vunpack.c.l.b16 %v19
  %v114 = vunpack.c.h.b16 %v19
  %v115 = vunpack.c.l.b16 %v20
  %v116 = vunpack.c.h.b16 %v20
  %v117 = vunpack.c.l.b16 %v21
  %v118 = vunpack.c.h.b16 %v21
  %v119 = vunpack.c.l.b16 %v22
  %v120 = vunpack.c.h.b16 %v22
  %v121 = vunpack.c.l.b16 %v23
  %v122 = vunpack.c.h.b16 %v23
  %v123 = vunpack.c.l.b16 %v24
  %v124 = vunpack.c.h.b16 %v24
  %v125 = vunpack.c.l.b16 %v25
  %v126 = vunpack.c.h.b16 %v25
  %v127 = vunpack.c.l.b16 %v26
  %v128 = vunpack.c.h.b16 %v26
  %v129 = vunpack.c.l.b16 %v27
  %v130 = vunpack.c.h.b16 %v27
  %v131 = vunpack.c.l.b16 %v28
  %v132 = vunpack.c.h.b16 %v28
  %v133 = vunpack.c.l.b16 %v29
  %v134 = vunpack.c.h.b16 %v29
  %v135 = vunpack.c.l.b16 %v30
  %v136 = vunpack.c.h.b16 %v30
  %v137 = vunpack.c.l.b16 %v31
  %v138 = vunpack.c.h.b16 %v31
  %v139 = vunpack.c.l.b16 %v32
  %v140 = vunpack.c.h.b16 %v32
  %v141 = vunpack.c.l.b16 %v33
  %v142 = vunpack.c.h.b16 %v33
  %v143 = vunpack.c.l.b16 %v34
  %v144 = vunpack.c.h.b16 %v34
  %v145 = vunpack.c.l.b16 %v35
  %v146 = vunpack.c.h.b16 %v35
  %v147 = vunpack.c.l.b16 %v36
  %v148 = vunpack.c.h.b16 %v36
  %v149 = vunpack.c.l.b16 %v37
  %v150 = vunpack.c.h.b16 %v37
  %v151 = vunpack.c.l.b16 %v38
  %v152 = vunpack.c.h.b16 %v38
  %v153 = vunpack.c.l.b16 %v39
  %v154 = vunpack.c.h.b16 %v39
  %v155 = vunpack.c.l.b16 %v40
  %v156 = vunpack.c.h.b16 %v40
  %v157 = vunpack.c.l.b16 %v41
  %v158 = vunpack.c.h.b16 %v41
  %v159 = vunpack.c.l.b16 %v42
  %v160 = vunpack.c.h.b16 %v42
  %v161 = vunpack.c.l.b16 %v43
  %v162 = vunpack.c.h.b16 %v43
  %v163 = vunpack.c.l.b16 %v44
  %v164 = vunpack.c.h.b16 %v44
  %v165 = vunpack.c.l.b16 %v45
  %v166 = vunpack.c.h.b16 %v45
  %v167 = vunpack.c.l.b16 %v46
  %v168 = vunpack.c.h.b16 %v46
  %v169 = vunpack.c.l.b16 %v47
  %v170 = vunpack.c.h.b16 %v47
  %v171 = vunpack.c.l.b16 %v48
  %v172 = vunpack.c.h.b16 %v48
  %v173 = vpack.c.b16 %v113, %v109
  %v174 = vpack.c.b16 %v114, %v110
  %v175 = vpack.c.b16 %v115, %v111
  %v176 = vpack.c.b16 %v116, %v112
  %v177 = vpack.c.b16 %v121, %v117
  %v178 = vpack.c.b16 %v122, %v118
  %v179 = vpack.c.b16 %v123, %v119
  %v180 = vpack.c.b16 %v124, %v120
  %v181 = vpack.c.b16 %v129, %v125
  %v182 = vpack.c.b16 %v130, %v126
  %v183 = vpack.c.b16 %v131, %v127
  %v184 = vpack.c.b16 %v132, %v128
  %v185 = vpack.c.b16 %v137, %v133
  %v186 = vpack.c.b16 %v138, %v134
  %v187 = vpack.c.b16 %v139, %v135
  %v188 = vpack.c.b16 %v140, %v136
  %v189 = vpack.c.b16 %v145, %v141
  %v190 = vpack.c.b16 %v146, %v142
  %v191 = vpack.c.b16 %v147, %v143
  %v192 = vpack.c.b16 %v148, %v144
  %v193 = vpack.c.b16 %v153, %v149
  %v194 = vpack.c.b16 %v154, %v150
  %v195 = vpack.c.b16 %v155, %v151
  %v196 = vpack.c.b16 %v156, %v152
  %v197 = vpack.c.b16 %v161, %v157
  %v198 = vpack.c.b16 %v162, %v158
  %v199 = vpack.c.b16 %v163, %v159
  %v200 = vpack.c.b16 %v164, %v160
  %v201 = vpack.c.b16 %v169, %v165
  %v202 = vpack.c.b16 %v170, %v166
  %v203 = vpack.c.b16 %v171, %v167
  %v204 = vpack.c.b16 %v172, %v168
  %237 = vmatprep.subr.bf16.mxu0 %v174
  %238 = vmatpush1.bf16.msra.mxu0 %v173
  %239 = vmatprep.subr.bf16.mxu0 %v178
  %240 = vmatpush1.bf16.msra.mxu0 %v177
  %241 = vmatprep.subr.bf16.mxu0 %v182
  %242 = vmatpush1.bf16.msra.mxu0 %v181
  %243 = vmatprep.subr.bf16.mxu0 %v186
  %244 = vmatpush1.bf16.msra.mxu0 %v185
  %245 = vmatprep.subr.bf16.mxu0 %v190
  %246 = vmatpush1.bf16.msra.mxu0 %v189
  %247 = vmatprep.subr.bf16.mxu0 %v194
  %248 = vmatpush1.bf16.msra.mxu0 %v193
  %249 = vmatprep.subr.bf16.mxu0 %v198
  %250 = vmatpush1.bf16.msra.mxu0 %v197
  %251 = vmatprep.subr.bf16.mxu0 %v202
  %252 = vmatpush1.bf16.msra.mxu0 %v201
  %253 = vmatprep.subr.bf16.mxu0 0
  %254 = vmatpush1.bf16.msra.mxu0 0
  %255 = vmatprep.subr.bf16.mxu0 0
  %256 = vmatpush1.bf16.msra.mxu0 0
  %257 = vmatprep.subr.bf16.mxu0 0
  %258 = vmatpush1.bf16.msra.mxu0 0
  %259 = vmatprep.subr.bf16.mxu0 0
  %260 = vmatpush1.bf16.msra.mxu0 0
  %261 = vmatprep.subr.bf16.mxu0 0
  %262 = vmatpush1.bf16.msra.mxu0 0
  %263 = vmatprep.subr.bf16.mxu0 0
  %264 = vmatpush1.bf16.msra.mxu0 0
  %265 = vmatprep.subr.bf16.mxu0 0
  %266 = vmatpush1.bf16.msra.mxu0 0
  %267 = vmatprep.subr.bf16.mxu0 0
  %268 = vmatpush1.bf16.msra.mxu0 0
  %269 = vmatprep.mubr.bf16.mxu0 0
  %270 = vmatmul.mubr.bf16.gmra.mrb[0].mxu0 %v75
  %v271 = vpop.f32.mrb[0].mxu0
  %v272 = vadd.f32 %v54, %v271
  %v273 = vpop.f32.mrb[0].mxu0
  %v274 = vadd.f32 %v58, %v273
  %v275 = vpop.f32.mrb[0].mxu0
  %v276 = vadd.f32 %v54, %v275
  %v277 = vpop.f32.mrb[0].mxu0
  %v278 = vadd.f32 %v58, %v277
  %279 = vdwg.mxu0
  %280 = vmatprep.subr.bf16.mxu0 %v176
  %281 = vmatpush1.bf16.msra.mxu0 %v175
  %282 = vmatprep.subr.bf16.mxu0 %v180
  %283 = vmatpush1.bf16.msra.mxu0 %v179
  %284 = vmatprep.subr.bf16.mxu0 %v184
  %285 = vmatpush1.bf16.msra.mxu0 %v183
  %286 = vmatprep.subr.bf16.mxu0 %v188
  %287 = vmatpush1.bf16.msra.mxu0 %v187
  %288 = vmatprep.subr.bf16.mxu0 %v192
  %289 = vmatpush1.bf16.msra.mxu0 %v191
  %290 = vmatprep.subr.bf16.mxu0 %v196
  %291 = vmatpush1.bf16.msra.mxu0 %v195
  %292 = vmatprep.subr.bf16.mxu0 %v200
  %293 = vmatpush1.bf16.msra.mxu0 %v199
  %294 = vmatprep.subr.bf16.mxu0 %v204
  %295 = vmatpush1.bf16.msra.mxu0 %v203
  %296 = vmatprep.subr.bf16.mxu0 0
  %297 = vmatpush1.bf16.msra.mxu0 0
  %298 = vmatprep.subr.bf16.mxu0 0
  %299 = vmatpush1.bf16.msra.mxu0 0
  %300 = vmatprep.subr.bf16.mxu0 0
  %301 = vmatpush1.bf16.msra.mxu0 0
  %302 = vmatprep.subr.bf16.mxu0 0
  %303 = vmatpush1.bf16.msra.mxu0 0
  %304 = vmatprep.subr.bf16.mxu0 0
  %305 = vmatpush1.bf16.msra.mxu0 0
  %306 = vmatprep.subr.bf16.mxu0 0
  %307 = vmatpush1.bf16.msra.mxu0 0
  %308 = vmatprep.subr.bf16.mxu0 0
  %309 = vmatpush1.bf16.msra.mxu0 0
  %310 = vmatprep.subr.bf16.mxu0 0
  %311 = vmatpush1.bf16.msra.mxu0 0
  %312 = vmatprep.mubr.bf16.mxu0 0
  %313 = vmatmul.mubr.bf16.gmra.mrb[0].mxu0 %v75
  %v314 = vpop.f32.mrb[0].mxu0
  %v315 = vadd.f32 %v62, %v314
  %v316 = vpop.f32.mrb[0].mxu0
  %v317 = vadd.f32 %v66, %v316
  %v318 = vpop.f32.mrb[0].mxu0
  %v319 = vadd.f32 %v62, %v318
  %v320 = vpop.f32.mrb[0].mxu0
  %v321 = vadd.f32 %v66, %v320
  %322 = vdwg.mxu0
  %v323 = vmul.f32 %v272, 0.5
  %v324 = vmul.f32 %v274, 0.5
  %v325 = vmul.f32 %v315, 0.5
  %v326 = vmul.f32 %v317, 0.5
  %v327 = vmul.f32 %v276, 0.5
  %v328 = vmul.f32 %v278, 0.5
  %v329 = vmul.f32 %v319, 0.5
  %v330 = vmul.f32 %v321, 0.5
  %v331 = vmul.f32 %v272, 0.044715
  %v332 = vmul.f32 %v274, 0.044715
  %v333 = vmul.f32 %v315, 0.044715
  %v334 = vmul.f32 %v317, 0.044715
  %v335 = vmul.f32 %v276, 0.044715
  %v336 = vmul.f32 %v278, 0.044715
  %v337 = vmul.f32 %v319, 0.044715
  %v338 = vmul.f32 %v321, 0.044715
  %v339 = vmul.f32 %v331, %v272
  %v340 = vmul.f32 %v332, %v274
  %v341 = vmul.f32 %v333, %v315
  %v342 = vmul.f32 %v334, %v317
  %v343 = vmul.f32 %v335, %v276
  %v344 = vmul.f32 %v336, %v278
  %v345 = vmul.f32 %v337, %v319
  %v346 = vmul.f32 %v338, %v321
  %v347 = vmul.f32 %v339, %v272
  %v348 = vmul.f32 %v340, %v274
  %v349 = vmul.f32 %v341, %v315
  %v350 = vmul.f32 %v342, %v317
  %v351 = vmul.f32 %v343, %v276
  %v352 = vmul.f32 %v344, %v278
  %v353 = vmul.f32 %v345, %v319
  %v354 = vmul.f32 %v346, %v321
  %v355 = vadd.f32 %v272, %v347
  %v356 = vadd.f32 %v274, %v348
  %v357 = vadd.f32 %v315, %v349
  %v358 = vadd.f32 %v317, %v350
  %v359 = vadd.f32 %v276, %v351
  %v360 = vadd.f32 %v278, %v352
  %v361 = vadd.f32 %v319, %v353
  %v362 = vadd.f32 %v321, %v354
  %v363 = vmul.f32 %v355, 0.7978846
  %v364 = vmul.f32 %v356, 0.7978846
  %v365 = vmul.f32 %v357, 0.7978846
  %v366 = vmul.f32 %v358, 0.7978846
  %v367 = vmul.f32 %v359, 0.7978846
  %v368 = vmul.f32 %v360, 0.7978846
  %v369 = vmul.f32 %v361, 0.7978846
  %v370 = vmul.f32 %v362, 0.7978846
  %v371 = vtanh.pop %v363
  %v372 = vtanh.pop %v364
  %v373 = vtanh.pop %v365
  %v374 = vtanh.pop %v366
  %v375 = vtanh.pop %v367
  %v376 = vtanh.pop %v368
  %v377 = vtanh.pop %v369
  %v378 = vtanh.pop %v370
  %v379 = vadd.f32 %v371, 1.0
  %v380 = vadd.f32 %v372, 1.0
  %v381 = vadd.f32 %v373, 1.0
  %v382 = vadd.f32 %v374, 1.0
  %v383 = vadd.f32 %v375, 1.0
  %v384 = vadd.f32 %v376, 1.0
  %v385 = vadd.f32 %v377, 1.0
  %v386 = vadd.f32 %v378, 1.0
  %v387 = vmul.f32 %v323, %v379
  %v388 = vmul.f32 %v324, %v380
  %v389 = vmul.f32 %v325, %v381
  %v390 = vmul.f32 %v326, %v382
  %v391 = vmul.f32 %v327, %v383
  %v392 = vmul.f32 %v328, %v384
  %v393 = vmul.f32 %v329, %v385
  %v394 = vmul.f32 %v330, %v386
  %v395 = vpack.c.bf16 %v391, %v387
  %v396 = vpack.c.bf16 %v392, %v388
  %v397 = vpack.c.bf16 %v393, %v389
  %v398 = vpack.c.bf16 %v394, %v390
  %v403 = vunpack.c.l.b16 %v395
  %v404 = vunpack.c.l.b16 %v396
  %v405 = vunpack.c.l.b16 %v397
  %v406 = vunpack.c.l.b16 %v398
  %v407 = vunpack.c.h.b16 %v395
  %v408 = vunpack.c.h.b16 %v396
  %v409 = vunpack.c.h.b16 %v397
  %v410 = vunpack.c.h.b16 %v398
  %v411 = vpack.c.b16 %v404, %v403
  %v412 = vpack.c.b16 %v406, %v405
  %v413 = vpack.c.b16 %v408, %v407
  %v414 = vpack.c.b16 %v410, %v409
  %419 = vst [vmem:[%s3] sm:$0xff] %v411
  %420 = vst [vmem:[%s3 + $0x8] sm:$0xff] %v412
  %421 = vst [vmem:[%s3 + $0x10] sm:$0xff] %v413
  %422 = vst [vmem:[%s3 + $0x18] sm:$0xff] %v414
  // Predicated region
  $region14: #{kobert_classifier_forward.16} parent=0 // pred_check
    _
  $region15: #{kobert_classifier_forward.16} parent=0 // pred_check_branch
    %424 = sbr.rel (0) target = $region17
  $region16: #{kobert_classifier_forward.16} parent=0 // pred_region
    _
  $region17: #{kobert_classifier_forward.16} parent=0 // pred_fallthru
    _
  // Predicated region
  $region18: #{kobert_classifier_forward.16} parent=0 // pred_check
    _
  $region19: #{kobert_classifier_forward.16} parent=0 // pred_check_branch
    %426 = sbr.rel (0) target = $region21
  $region20: #{kobert_classifier_forward.16} parent=0 // pred_region
    _
  $region21: #{kobert_classifier_forward.16} parent=0 // pred_fallthru
    _

// kernel: kobert_classifier_forward.23
$region0: #{kobert_classifier_forward.23}
  #allocation0 [shape = 'u32[]', space=smem, size = 0x4, offset = 0x4, fixed_abs, tag = 'smem constant byte address 0x4 - core index']
  #allocation1 [shape = 'u32[144,128]{1,0:T(1,128)}', space=vmem, size = 0x12000, scoped, tag = 'internal scratch']
  %s0 = inlined_call_operand.vmem [shape: bf16[8,128], index: 0, kind: input, shape index: {}]
  %s1 = inlined_call_operand.vmem [shape: bf16[128,128], index: 1, kind: input, shape index: {}]
  %s2 = inlined_call_operand.vmem [shape: f32[1,128], index: 2, kind: input, shape index: {}]
  %s3 = inlined_call_operand.vmem [shape: bf16[128,128], index: 3, kind: input, shape index: {}]
  %s4 = inlined_call_operand.vmem [shape: f32[1,128], index: 4, kind: input, shape index: {}]
  %s5 = inlined_call_operand.vmem [shape: f32[8,128], index: 5, kind: output, shape index: {}]
  %s6 = sld [smem:[#allocation0]]
  $region30: #{kobert_classifier_forward.23} parent=0
    _
  %s8 = ssub.s32 1, %s6
  %s9 = scalar_select 0, %s8, %s6
  // Predicated region
  $region2: #{kobert_classifier_forward.23} parent=0 // pred_check
    _
  $region3: #{kobert_classifier_forward.23} parent=0 // pred_check_branch
    %11 = sbr.rel (0) target = $region5
  $region4: #{kobert_classifier_forward.23} parent=0 // pred_region
    _
  $region5: #{kobert_classifier_forward.23} parent=0 // pred_fallthru
    _
  // Predicated region
  $region6: #{kobert_classifier_forward.23} parent=0 // pred_check
    _
  $region7: #{kobert_classifier_forward.23} parent=0 // pred_check_branch
    %13 = sbr.rel (0) target = $region9
  $region8: #{kobert_classifier_forward.23} parent=0 // pred_region
    _
  $region9: #{kobert_classifier_forward.23} parent=0 // pred_fallthru
    _
  // Predicated region
  $region10: #{kobert_classifier_forward.23} parent=0 // pred_check
    _
  $region11: #{kobert_classifier_forward.23} parent=0 // pred_check_branch
    %15 = sbr.rel (0) target = $region13
  $region12: #{kobert_classifier_forward.23} parent=0 // pred_region
    _
  $region13: #{kobert_classifier_forward.23} parent=0 // pred_fallthru
    _
  // Predicated region
  $region14: #{kobert_classifier_forward.23} parent=0 // pred_check
    _
  $region15: #{kobert_classifier_forward.23} parent=0 // pred_check_branch
    %17 = sbr.rel (0) target = $region17
  $region16: #{kobert_classifier_forward.23} parent=0 // pred_region
    _
  $region17: #{kobert_classifier_forward.23} parent=0 // pred_fallthru
    _
  // Predicated region
  $region18: #{kobert_classifier_forward.23} parent=0 // pred_check
    _
  $region19: #{kobert_classifier_forward.23} parent=0 // pred_check_branch
    %19 = sbr.rel (0) target = $region21
  $region20: #{kobert_classifier_forward.23} parent=0 // pred_region
    _
  $region21: #{kobert_classifier_forward.23} parent=0 // pred_fallthru
    _
  %v21 = vld [vmem:[%s0] sm:$0xf]
  %v22 = vld [vmem:[%s1] sm:$0xf]
  %v23 = vld [vmem:[%s1 + $0x4] sm:$0xf]
  %v24 = vld [vmem:[%s1 + $0x8] sm:$0xf]
  %v25 = vld [vmem:[%s1 + $0xc] sm:$0xf]
  %v26 = vld [vmem:[%s1 + $0x10] sm:$0xf]
  %v27 = vld [vmem:[%s1 + $0x14] sm:$0xf]
  %v28 = vld [vmem:[%s1 + $0x18] sm:$0xf]
  %v29 = vld [vmem:[%s1 + $0x1c] sm:$0xf]
  %v30 = vld [vmem:[%s1 + $0x20] sm:$0xf]
  %v31 = vld [vmem:[%s1 + $0x24] sm:$0xf]
  %v32 = vld [vmem:[%s1 + $0x28] sm:$0xf]
  %v33 = vld [vmem:[%s1 + $0x2c] sm:$0xf]
  %v34 = vld [vmem:[%s1 + $0x30] sm:$0xf]
  %v35 = vld [vmem:[%s1 + $0x34] sm:$0xf]
  %v36 = vld [vmem:[%s1 + $0x38] sm:$0xf]
  %v37 = vld [vmem:[%s1 + $0x3c] sm:$0xf]
  %v38 = vld [vmem:[%s2] sm:$0x1]
  %v40 = vlaneseq
  %v41 = vshrl.u32 %v40, 7
  %v42 = vsub.s32 0, %v41
  %v43 = vrot.slane %v38, %v42
  %v61 = vunpack.c.l.b16 %v22
  %v62 = vunpack.c.l.b16 %v23
  %v63 = vunpack.c.l.b16 %v24
  %v64 = vunpack.c.l.b16 %v25
  %v65 = vunpack.c.l.b16 %v26
  %v66 = vunpack.c.l.b16 %v27
  %v67 = vunpack.c.l.b16 %v28
  %v68 = vunpack.c.l.b16 %v29
  %v69 = vunpack.c.l.b16 %v30
  %v70 = vunpack.c.l.b16 %v31
  %v71 = vunpack.c.l.b16 %v32
  %v72 = vunpack.c.l.b16 %v33
  %v73 = vunpack.c.l.b16 %v34
  %v74 = vunpack.c.l.b16 %v35
  %v75 = vunpack.c.l.b16 %v36
  %v76 = vunpack.c.l.b16 %v37
  %v77 = vpack.c.b16 %v62, %v61
  %v78 = vpack.c.b16 %v64, %v63
  %v79 = vpack.c.b16 %v66, %v65
  %v80 = vpack.c.b16 %v68, %v67
  %v81 = vpack.c.b16 %v70, %v69
  %v82 = vpack.c.b16 %v72, %v71
  %v83 = vpack.c.b16 %v74, %v73
  %v84 = vpack.c.b16 %v76, %v75
  %93 = vmatprep.subr.bf16.mxu0 0
  %94 = vmatpush1.bf16.msra.mxu0 %v77
  %95 = vmatprep.subr.bf16.mxu0 0
  %96 = vmatpush1.bf16.msra.mxu0 %v78
  %97 = vmatprep.subr.bf16.mxu0 0
  %98 = vmatpush1.bf16.msra.mxu0 %v79
  %99 = vmatprep.subr.bf16.mxu0 0
  %100 = vmatpush1.bf16.msra.mxu0 %v80
  %101 = vmatprep.subr.bf16.mxu0 0
  %102 = vmatpush1.bf16.msra.mxu0 %v81
  %103 = vmatprep.subr.bf16.mxu0 0
  %104 = vmatpush1.bf16.msra.mxu0 %v82
  %105 = vmatprep.subr.bf16.mxu0 0
  %106 = vmatpush1.bf16.msra.mxu0 %v83
  %107 = vmatprep.subr.bf16.mxu0 0
  %108 = vmatpush1.bf16.msra.mxu0 %v84
  %109 = vmatprep.subr.bf16.mxu0 0
  %110 = vmatpush1.bf16.msra.mxu0 0
  %111 = vmatprep.subr.bf16.mxu0 0
  %112 = vmatpush1.bf16.msra.mxu0 0
  %113 = vmatprep.subr.bf16.mxu0 0
  %114 = vmatpush1.bf16.msra.mxu0 0
  %115 = vmatprep.subr.bf16.mxu0 0
  %116 = vmatpush1.bf16.msra.mxu0 0
  %117 = vmatprep.subr.bf16.mxu0 0
  %118 = vmatpush1.bf16.msra.mxu0 0
  %119 = vmatprep.subr.bf16.mxu0 0
  %120 = vmatpush1.bf16.msra.mxu0 0
  %121 = vmatprep.subr.bf16.mxu0 0
  %122 = vmatpush1.bf16.msra.mxu0 0
  %123 = vmatprep.subr.bf16.mxu0 0
  %124 = vmatpush1.bf16.msra.mxu0 0
  %125 = vmatprep.mubr.bf16.mxu0 0
  %126 = vmatmul.mubr.bf16.gmra.mrb[0].mxu0 %v21
  %v127 = vpop.f32.mrb[0].mxu0
  %v128 = vadd.f32 %v43, %v127
  %v129 = vpop.f32.mrb[0].mxu0
  %v130 = vpop.f32.mrb[0].mxu0
  %v131 = vpop.f32.mrb[0].mxu0
  %132 = vdwg.mxu0
  %v133 = vtanh.pop %v128
  %v134 = vpack.c.bf16 %v133, %v133
  %v135 = vld [vmem:[%s3] sm:$0xf]
  %v136 = vld [vmem:[%s3 + $0x4] sm:$0xf]
  %v137 = vld [vmem:[%s3 + $0x8] sm:$0xf]
  %v138 = vld [vmem:[%s3 + $0xc] sm:$0xf]
  %v139 = vld [vmem:[%s3 + $0x10] sm:$0xf]
  %v140 = vld [vmem:[%s3 + $0x14] sm:$0xf]
  %v141 = vld [vmem:[%s3 + $0x18] sm:$0xf]
  %v142 = vld [vmem:[%s3 + $0x1c] sm:$0xf]
  %v143 = vld [vmem:[%s3 + $0x20] sm:$0xf]
  %v144 = vld [vmem:[%s3 + $0x24] sm:$0xf]
  %v145 = vld [vmem:[%s3 + $0x28] sm:$0xf]
  %v146 = vld [vmem:[%s3 + $0x2c] sm:$0xf]
  %v147 = vld [vmem:[%s3 + $0x30] sm:$0xf]
  %v148 = vld [vmem:[%s3 + $0x34] sm:$0xf]
  %v149 = vld [vmem:[%s3 + $0x38] sm:$0xf]
  %v150 = vld [vmem:[%s3 + $0x3c] sm:$0xf]
  %v151 = vld [vmem:[%s4] sm:$0x1]
  %v153 = vlaneseq
  %v154 = vshrl.u32 %v153, 7
  %v155 = vsub.s32 0, %v154
  %v156 = vrot.slane %v151, %v155
  %v174 = vunpack.c.l.b16 %v135
  %v175 = vunpack.c.l.b16 %v136
  %v176 = vunpack.c.l.b16 %v137
  %v177 = vunpack.c.l.b16 %v138
  %v178 = vunpack.c.l.b16 %v139
  %v179 = vunpack.c.l.b16 %v140
  %v180 = vunpack.c.l.b16 %v141
  %v181 = vunpack.c.l.b16 %v142
  %v182 = vunpack.c.l.b16 %v143
  %v183 = vunpack.c.l.b16 %v144
  %v184 = vunpack.c.l.b16 %v145
  %v185 = vunpack.c.l.b16 %v146
  %v186 = vunpack.c.l.b16 %v147
  %v187 = vunpack.c.l.b16 %v148
  %v188 = vunpack.c.l.b16 %v149
  %v189 = vunpack.c.l.b16 %v150
  %v190 = vpack.c.b16 %v175, %v174
  %v191 = vpack.c.b16 %v177, %v176
  %v192 = vpack.c.b16 %v179, %v178
  %v193 = vpack.c.b16 %v181, %v180
  %v194 = vpack.c.b16 %v183, %v182
  %v195 = vpack.c.b16 %v185, %v184
  %v196 = vpack.c.b16 %v187, %v186
  %v197 = vpack.c.b16 %v189, %v188
  %206 = vmatprep.subr.bf16.mxu0 0
  %207 = vmatpush1.bf16.msra.mxu0 %v190
  %208 = vmatprep.subr.bf16.mxu0 0
  %209 = vmatpush1.bf16.msra.mxu0 %v191
  %210 = vmatprep.subr.bf16.mxu0 0
  %211 = vmatpush1.bf16.msra.mxu0 %v192
  %212 = vmatprep.subr.bf16.mxu0 0
  %213 = vmatpush1.bf16.msra.mxu0 %v193
  %214 = vmatprep.subr.bf16.mxu0 0
  %215 = vmatpush1.bf16.msra.mxu0 %v194
  %216 = vmatprep.subr.bf16.mxu0 0
  %217 = vmatpush1.bf16.msra.mxu0 %v195
  %218 = vmatprep.subr.bf16.mxu0 0
  %219 = vmatpush1.bf16.msra.mxu0 %v196
  %220 = vmatprep.subr.bf16.mxu0 0
  %221 = vmatpush1.bf16.msra.mxu0 %v197
  %222 = vmatprep.subr.bf16.mxu0 0
  %223 = vmatpush1.bf16.msra.mxu0 0
  %224 = vmatprep.subr.bf16.mxu0 0
  %225 = vmatpush1.bf16.msra.mxu0 0
  %226 = vmatprep.subr.bf16.mxu0 0
  %227 = vmatpush1.bf16.msra.mxu0 0
  %228 = vmatprep.subr.bf16.mxu0 0
  %229 = vmatpush1.bf16.msra.mxu0 0
  %230 = vmatprep.subr.bf16.mxu0 0
  %231 = vmatpush1.bf16.msra.mxu0 0
  %232 = vmatprep.subr.bf16.mxu0 0
  %233 = vmatpush1.bf16.msra.mxu0 0
  %234 = vmatprep.subr.bf16.mxu0 0
  %235 = vmatpush1.bf16.msra.mxu0 0
  %236 = vmatprep.subr.bf16.mxu0 0
  %237 = vmatpush1.bf16.msra.mxu0 0
  %238 = vmatprep.mubr.bf16.mxu0 0
  %239 = vmatmul.mubr.bf16.gmra.mrb[0].mxu0 %v134
  %v240 = vpop.f32.mrb[0].mxu0
  %v241 = vadd.f32 %v156, %v240
  %v242 = vpop.f32.mrb[0].mxu0
  %v243 = vpop.f32.mrb[0].mxu0
  %v244 = vpop.f32.mrb[0].mxu0
  %245 = vdwg.mxu0
  %246 = vst [vmem:[%s5] sm:$0xff] %v241
  // Predicated region
  $region22: #{kobert_classifier_forward.23} parent=0 // pred_check
    _
  $region23: #{kobert_classifier_forward.23} parent=0 // pred_check_branch
    %248 = sbr.rel (0) target = $region25
  $region24: #{kobert_classifier_forward.23} parent=0 // pred_region
    _
  $region25: #{kobert_classifier_forward.23} parent=0 // pred_fallthru
    _
  // Predicated region
  $region26: #{kobert_classifier_forward.23} parent=0 // pred_check
    _
  $region27: #{kobert_classifier_forward.23} parent=0 // pred_check_branch
    %250 = sbr.rel (0) target = $region29
  $region28: #{kobert_classifier_forward.23} parent=0 // pred_region
    _
  $region29: #{kobert_classifier_forward.23} parent=0 // pred_fallthru
    _

// kernel: kobert_classifier_forward.17
$region0: #{kobert_classifier_forward.17}
  #allocation0 [shape = 'u32[]', space=smem, size = 0x4, offset = 0x4, fixed_abs, tag = 'smem constant byte address 0x4 - core index']
  #allocation1 [shape = 'u32[144,128]{1,0:T(1,128)}', space=vmem, size = 0x12000, scoped, tag = 'internal scratch']
  %s0 = inlined_call_operand.vmem [shape: bf16[16,512], index: 0, kind: input, shape index: {}]
  %s1 = inlined_call_operand.vmem [shape: bf16[512,128], index: 1, kind: input, shape index: {}]
  %s2 = inlined_call_operand.vmem [shape: f32[1,128], index: 2, kind: input, shape index: {}]
  %s3 = inlined_call_operand.vmem [shape: bf16[16,128], index: 3, kind: input, shape index: {}]
  %s4 = inlined_call_operand.vmem [shape: f32[1,128], index: 4, kind: input, shape index: {}]
  %s5 = inlined_call_operand.vmem [shape: f32[1,128], index: 5, kind: input, shape index: {}]
  %s6 = inlined_call_operand.vmem [shape: bf16[16,128], index: 6, kind: output, shape index: {}]
  %s7 = sld [smem:[#allocation0]]
  $region34: #{kobert_classifier_forward.17} parent=0
    _
  %s9 = ssub.s32 1, %s7
  %s10 = scalar_select 0, %s9, %s7
  // Predicated region
  $region2: #{kobert_classifier_forward.17} parent=0 // pred_check
    _
  $region3: #{kobert_classifier_forward.17} parent=0 // pred_check_branch
    %12 = sbr.rel (0) target = $region5
  $region4: #{kobert_classifier_forward.17} parent=0 // pred_region
    _
  $region5: #{kobert_classifier_forward.17} parent=0 // pred_fallthru
    _
  // Predicated region
  $region6: #{kobert_classifier_forward.17} parent=0 // pred_check
    _
  $region7: #{kobert_classifier_forward.17} parent=0 // pred_check_branch
    %14 = sbr.rel (0) target = $region9
  $region8: #{kobert_classifier_forward.17} parent=0 // pred_region
    _
  $region9: #{kobert_classifier_forward.17} parent=0 // pred_fallthru
    _
  // Predicated region
  $region10: #{kobert_classifier_forward.17} parent=0 // pred_check
    _
  $region11: #{kobert_classifier_forward.17} parent=0 // pred_check_branch
    %16 = sbr.rel (0) target = $region13
  $region12: #{kobert_classifier_forward.17} parent=0 // pred_region
    _
  $region13: #{kobert_classifier_forward.17} parent=0 // pred_fallthru
    _
  // Predicated region
  $region14: #{kobert_classifier_forward.17} parent=0 // pred_check
    _
  $region15: #{kobert_classifier_forward.17} parent=0 // pred_check_branch
    %18 = sbr.rel (0) target = $region17
  $region16: #{kobert_classifier_forward.17} parent=0 // pred_region
    _
  $region17: #{kobert_classifier_forward.17} parent=0 // pred_fallthru
    _
  // Predicated region
  $region18: #{kobert_classifier_forward.17} parent=0 // pred_check
    _
  $region19: #{kobert_classifier_forward.17} parent=0 // pred_check_branch
    %20 = sbr.rel (0) target = $region21
  $region20: #{kobert_classifier_forward.17} parent=0 // pred_region
    _
  $region21: #{kobert_classifier_forward.17} parent=0 // pred_fallthru
    _
  // Predicated region
  $region22: #{kobert_classifier_forward.17} parent=0 // pred_check
    _
  $region23: #{kobert_classifier_forward.17} parent=0 // pred_check_branch
    %22 = sbr.rel (0) target = $region25
  $region24: #{kobert_classifier_forward.17} parent=0 // pred_region
    _
  $region25: #{kobert_classifier_forward.17} parent=0 // pred_fallthru
    _
  %v24 = vld [vmem:[%s0] sm:$0xff]
  %v25 = vld [vmem:[%s0 + $0x8] sm:$0xff]
  %v26 = vld [vmem:[%s0 + $0x10] sm:$0xff]
  %v27 = vld [vmem:[%s0 + $0x18] sm:$0xff]
  %v28 = vld [vmem:[%s1] sm:$0xf]
  %v29 = vld [vmem:[%s1 + $0x4] sm:$0xf]
  %v30 = vld [vmem:[%s1 + $0x8] sm:$0xf]
  %v31 = vld [vmem:[%s1 + $0xc] sm:$0xf]
  %v32 = vld [vmem:[%s1 + $0x10] sm:$0xf]
  %v33 = vld [vmem:[%s1 + $0x14] sm:$0xf]
  %v34 = vld [vmem:[%s1 + $0x18] sm:$0xf]
  %v35 = vld [vmem:[%s1 + $0x1c] sm:$0xf]
  %v36 = vld [vmem:[%s1 + $0x20] sm:$0xf]
  %v37 = vld [vmem:[%s1 + $0x24] sm:$0xf]
  %v38 = vld [vmem:[%s1 + $0x28] sm:$0xf]
  %v39 = vld [vmem:[%s1 + $0x2c] sm:$0xf]
  %v40 = vld [vmem:[%s1 + $0x30] sm:$0xf]
  %v41 = vld [vmem:[%s1 + $0x34] sm:$0xf]
  %v42 = vld [vmem:[%s1 + $0x38] sm:$0xf]
  %v43 = vld [vmem:[%s1 + $0x3c] sm:$0xf]
  %v44 = vld [vmem:[%s1 + $0x40] sm:$0xf]
  %v45 = vld [vmem:[%s1 + $0x44] sm:$0xf]
  %v46 = vld [vmem:[%s1 + $0x48] sm:$0xf]
  %v47 = vld [vmem:[%s1 + $0x4c] sm:$0xf]
  %v48 = vld [vmem:[%s1 + $0x50] sm:$0xf]
  %v49 = vld [vmem:[%s1 + $0x54] sm:$0xf]
  %v50 = vld [vmem:[%s1 + $0x58] sm:$0xf]
  %v51 = vld [vmem:[%s1 + $0x5c] sm:$0xf]
  %v52 = vld [vmem:[%s1 + $0x60] sm:$0xf]
  %v53 = vld [vmem:[%s1 + $0x64] sm:$0xf]
  %v54 = vld [vmem:[%s1 + $0x68] sm:$0xf]
  %v55 = vld [vmem:[%s1 + $0x6c] sm:$0xf]
  %v56 = vld [vmem:[%s1 + $0x70] sm:$0xf]
  %v57 = vld [vmem:[%s1 + $0x74] sm:$0xf]
  %v58 = vld [vmem:[%s1 + $0x78] sm:$0xf]
  %v59 = vld [vmem:[%s1 + $0x7c] sm:$0xf]
  %v60 = vld [vmem:[%s1 + $0x80] sm:$0xf]
  %v61 = vld [vmem:[%s1 + $0x84] sm:$0xf]
  %v62 = vld [vmem:[%s1 + $0x88] sm:$0xf]
  %v63 = vld [vmem:[%s1 + $0x8c] sm:$0xf]
  %v64 = vld [vmem:[%s1 + $0x90] sm:$0xf]
  %v65 = vld [vmem:[%s1 + $0x94] sm:$0xf]
  %v66 = vld [vmem:[%s1 + $0x98] sm:$0xf]
  %v67 = vld [vmem:[%s1 + $0x9c] sm:$0xf]
  %v68 = vld [vmem:[%s1 + $0xa0] sm:$0xf]
  %v69 = vld [vmem:[%s1 + $0xa4] sm:$0xf]
  %v70 = vld [vmem:[%s1 + $0xa8] sm:$0xf]
  %v71 = vld [vmem:[%s1 + $0xac] sm:$0xf]
  %v72 = vld [vmem:[%s1 + $0xb0] sm:$0xf]
  %v73 = vld [vmem:[%s1 + $0xb4] sm:$0xf]
  %v74 = vld [vmem:[%s1 + $0xb8] sm:$0xf]
  %v75 = vld [vmem:[%s1 + $0xbc] sm:$0xf]
  %v76 = vld [vmem:[%s1 + $0xc0] sm:$0xf]
  %v77 = vld [vmem:[%s1 + $0xc4] sm:$0xf]
  %v78 = vld [vmem:[%s1 + $0xc8] sm:$0xf]
  %v79 = vld [vmem:[%s1 + $0xcc] sm:$0xf]
  %v80 = vld [vmem:[%s1 + $0xd0] sm:$0xf]
  %v81 = vld [vmem:[%s1 + $0xd4] sm:$0xf]
  %v82 = vld [vmem:[%s1 + $0xd8] sm:$0xf]
  %v83 = vld [vmem:[%s1 + $0xdc] sm:$0xf]
  %v84 = vld [vmem:[%s1 + $0xe0] sm:$0xf]
  %v85 = vld [vmem:[%s1 + $0xe4] sm:$0xf]
  %v86 = vld [vmem:[%s1 + $0xe8] sm:$0xf]
  %v87 = vld [vmem:[%s1 + $0xec] sm:$0xf]
  %v88 = vld [vmem:[%s1 + $0xf0] sm:$0xf]
  %v89 = vld [vmem:[%s1 + $0xf4] sm:$0xf]
  %v90 = vld [vmem:[%s1 + $0xf8] sm:$0xf]
  %v91 = vld [vmem:[%s1 + $0xfc] sm:$0xf]
  %v92 = vld [vmem:[%s2] sm:$0x1]
  %v94 = vlaneseq
  %v95 = vshrl.u32 %v94, 7
  %v96 = vsub.s32 0, %v95
  %v97 = vrot.slane %v92, %v96
  %v103 = vunpack.c.l.b16 %v24
  %v104 = vunpack.c.h.b16 %v24
  %v105 = vunpack.c.l.b16 %v25
  %v106 = vunpack.c.h.b16 %v25
  %v107 = vunpack.c.l.b16 %v26
  %v108 = vunpack.c.h.b16 %v26
  %v109 = vunpack.c.l.b16 %v27
  %v110 = vunpack.c.h.b16 %v27
  %v111 = vpack.c.b16 %v107, %v103
  %v112 = vpack.c.b16 %v108, %v104
  %v113 = vpack.c.b16 %v109, %v105
  %v114 = vpack.c.b16 %v110, %v106
  %v183 = vunpack.c.l.b16 %v28
  %v184 = vunpack.c.l.b16 %v29
  %v185 = vunpack.c.l.b16 %v30
  %v186 = vunpack.c.l.b16 %v31
  %v187 = vunpack.c.l.b16 %v32
  %v188 = vunpack.c.l.b16 %v33
  %v189 = vunpack.c.l.b16 %v34
  %v190 = vunpack.c.l.b16 %v35
  %v191 = vunpack.c.l.b16 %v36
  %v192 = vunpack.c.l.b16 %v37
  %v193 = vunpack.c.l.b16 %v38
  %v194 = vunpack.c.l.b16 %v39
  %v195 = vunpack.c.l.b16 %v40
  %v196 = vunpack.c.l.b16 %v41
  %v197 = vunpack.c.l.b16 %v42
  %v198 = vunpack.c.l.b16 %v43
  %v199 = vunpack.c.l.b16 %v44
  %v200 = vunpack.c.l.b16 %v45
  %v201 = vunpack.c.l.b16 %v46
  %v202 = vunpack.c.l.b16 %v47
  %v203 = vunpack.c.l.b16 %v48
  %v204 = vunpack.c.l.b16 %v49
  %v205 = vunpack.c.l.b16 %v50
  %v206 = vunpack.c.l.b16 %v51
  %v207 = vunpack.c.l.b16 %v52
  %v208 = vunpack.c.l.b16 %v53
  %v209 = vunpack.c.l.b16 %v54
  %v210 = vunpack.c.l.b16 %v55
  %v211 = vunpack.c.l.b16 %v56
  %v212 = vunpack.c.l.b16 %v57
  %v213 = vunpack.c.l.b16 %v58
  %v214 = vunpack.c.l.b16 %v59
  %v215 = vunpack.c.l.b16 %v60
  %v216 = vunpack.c.l.b16 %v61
  %v217 = vunpack.c.l.b16 %v62
  %v218 = vunpack.c.l.b16 %v63
  %v219 = vunpack.c.l.b16 %v64
  %v220 = vunpack.c.l.b16 %v65
  %v221 = vunpack.c.l.b16 %v66
  %v222 = vunpack.c.l.b16 %v67
  %v223 = vunpack.c.l.b16 %v68
  %v224 = vunpack.c.l.b16 %v69
  %v225 = vunpack.c.l.b16 %v70
  %v226 = vunpack.c.l.b16 %v71
  %v227 = vunpack.c.l.b16 %v72
  %v228 = vunpack.c.l.b16 %v73
  %v229 = vunpack.c.l.b16 %v74
  %v230 = vunpack.c.l.b16 %v75
  %v231 = vunpack.c.l.b16 %v76
  %v232 = vunpack.c.l.b16 %v77
  %v233 = vunpack.c.l.b16 %v78
  %v234 = vunpack.c.l.b16 %v79
  %v235 = vunpack.c.l.b16 %v80
  %v236 = vunpack.c.l.b16 %v81
  %v237 = vunpack.c.l.b16 %v82
  %v238 = vunpack.c.l.b16 %v83
  %v239 = vunpack.c.l.b16 %v84
  %v240 = vunpack.c.l.b16 %v85
  %v241 = vunpack.c.l.b16 %v86
  %v242 = vunpack.c.l.b16 %v87
  %v243 = vunpack.c.l.b16 %v88
  %v244 = vunpack.c.l.b16 %v89
  %v245 = vunpack.c.l.b16 %v90
  %v246 = vunpack.c.l.b16 %v91
  %v247 = vpack.c.b16 %v184, %v183
  %v248 = vpack.c.b16 %v186, %v185
  %v249 = vpack.c.b16 %v188, %v187
  %v250 = vpack.c.b16 %v190, %v189
  %v251 = vpack.c.b16 %v192, %v191
  %v252 = vpack.c.b16 %v194, %v193
  %v253 = vpack.c.b16 %v196, %v195
  %v254 = vpack.c.b16 %v198, %v197
  %v255 = vpack.c.b16 %v200, %v199
  %v256 = vpack.c.b16 %v202, %v201
  %v257 = vpack.c.b16 %v204, %v203
  %v258 = vpack.c.b16 %v206, %v205
  %v259 = vpack.c.b16 %v208, %v207
  %v260 = vpack.c.b16 %v210, %v209
  %v261 = vpack.c.b16 %v212, %v211
  %v262 = vpack.c.b16 %v214, %v213
  %v263 = vpack.c.b16 %v216, %v215
  %v264 = vpack.c.b16 %v218, %v217
  %v265 = vpack.c.b16 %v220, %v219
  %v266 = vpack.c.b16 %v222, %v221
  %v267 = vpack.c.b16 %v224, %v223
  %v268 = vpack.c.b16 %v226, %v225
  %v269 = vpack.c.b16 %v228, %v227
  %v270 = vpack.c.b16 %v230, %v229
  %v271 = vpack.c.b16 %v232, %v231
  %v272 = vpack.c.b16 %v234, %v233
  %v273 = vpack.c.b16 %v236, %v235
  %v274 = vpack.c.b16 %v238, %v237
  %v275 = vpack.c.b16 %v240, %v239
  %v276 = vpack.c.b16 %v242, %v241
  %v277 = vpack.c.b16 %v244, %v243
  %v278 = vpack.c.b16 %v246, %v245
  %311 = vmatprep.subr.bf16.mxu0 0
  %312 = vmatpush1.bf16.msra.mxu0 %v247
  %313 = vmatprep.subr.bf16.mxu0 0
  %314 = vmatpush1.bf16.msra.mxu0 %v248
  %315 = vmatprep.subr.bf16.mxu0 0
  %316 = vmatpush1.bf16.msra.mxu0 %v249
  %317 = vmatprep.subr.bf16.mxu0 0
  %318 = vmatpush1.bf16.msra.mxu0 %v250
  %319 = vmatprep.subr.bf16.mxu0 0
  %320 = vmatpush1.bf16.msra.mxu0 %v251
  %321 = vmatprep.subr.bf16.mxu0 0
  %322 = vmatpush1.bf16.msra.mxu0 %v252
  %323 = vmatprep.subr.bf16.mxu0 0
  %324 = vmatpush1.bf16.msra.mxu0 %v253
  %325 = vmatprep.subr.bf16.mxu0 0
  %326 = vmatpush1.bf16.msra.mxu0 %v254
  %327 = vmatprep.subr.bf16.mxu0 0
  %328 = vmatpush1.bf16.msra.mxu0 %v255
  %329 = vmatprep.subr.bf16.mxu0 0
  %330 = vmatpush1.bf16.msra.mxu0 %v256
  %331 = vmatprep.subr.bf16.mxu0 0
  %332 = vmatpush1.bf16.msra.mxu0 %v257
  %333 = vmatprep.subr.bf16.mxu0 0
  %334 = vmatpush1.bf16.msra.mxu0 %v258
  %335 = vmatprep.subr.bf16.mxu0 0
  %336 = vmatpush1.bf16.msra.mxu0 %v259
  %337 = vmatprep.subr.bf16.mxu0 0
  %338 = vmatpush1.bf16.msra.mxu0 %v260
  %339 = vmatprep.subr.bf16.mxu0 0
  %340 = vmatpush1.bf16.msra.mxu0 %v261
  %341 = vmatprep.subr.bf16.mxu0 0
  %342 = vmatpush1.bf16.msra.mxu0 %v262
  %343 = vmatprep.mubr.bf16.mxu0 %v112
  %344 = vmatmul.mubr.bf16.gmra.mrb[0].mxu0 %v111
  %v345 = vpop.f32.mrb[0].mxu0
  %v346 = vadd.f32 %v97, %v345
  %v347 = vpop.f32.mrb[0].mxu0
  %v348 = vpop.f32.mrb[0].mxu0
  %v349 = vadd.f32 %v97, %v348
  %v350 = vpop.f32.mrb[0].mxu0
  %351 = vdwg.mxu0
  %352 = vmatprep.subr.bf16.mxu0 0
  %353 = vmatpush1.bf16.msra.mxu0 %v263
  %354 = vmatprep.subr.bf16.mxu0 0
  %355 = vmatpush1.bf16.msra.mxu0 %v264
  %356 = vmatprep.subr.bf16.mxu0 0
  %357 = vmatpush1.bf16.msra.mxu0 %v265
  %358 = vmatprep.subr.bf16.mxu0 0
  %359 = vmatpush1.bf16.msra.mxu0 %v266
  %360 = vmatprep.subr.bf16.mxu0 0
  %361 = vmatpush1.bf16.msra.mxu0 %v267
  %362 = vmatprep.subr.bf16.mxu0 0
  %363 = vmatpush1.bf16.msra.mxu0 %v268
  %364 = vmatprep.subr.bf16.mxu0 0
  %365 = vmatpush1.bf16.msra.mxu0 %v269
  %366 = vmatprep.subr.bf16.mxu0 0
  %367 = vmatpush1.bf16.msra.mxu0 %v270
  %368 = vmatprep.subr.bf16.mxu0 0
  %369 = vmatpush1.bf16.msra.mxu0 %v271
  %370 = vmatprep.subr.bf16.mxu0 0
  %371 = vmatpush1.bf16.msra.mxu0 %v272
  %372 = vmatprep.subr.bf16.mxu0 0
  %373 = vmatpush1.bf16.msra.mxu0 %v273
  %374 = vmatprep.subr.bf16.mxu0 0
  %375 = vmatpush1.bf16.msra.mxu0 %v274
  %376 = vmatprep.subr.bf16.mxu0 0
  %377 = vmatpush1.bf16.msra.mxu0 %v275
  %378 = vmatprep.subr.bf16.mxu0 0
  %379 = vmatpush1.bf16.msra.mxu0 %v276
  %380 = vmatprep.subr.bf16.mxu0 0
  %381 = vmatpush1.bf16.msra.mxu0 %v277
  %382 = vmatprep.subr.bf16.mxu0 0
  %383 = vmatpush1.bf16.msra.mxu0 %v278
  %384 = vmatprep.mubr.bf16.mxu0 %v114
  %385 = vmatmul.mubr.bf16.gmra.mrb[0].mxu0 %v113
  %v386 = vpop.f32.mrb[0].mxu0
  %v387 = vadd.f32 %v346, %v386
  %v388 = vpop.f32.mrb[0].mxu0
  %v389 = vpop.f32.mrb[0].mxu0
  %v390 = vadd.f32 %v349, %v389
  %v391 = vpop.f32.mrb[0].mxu0
  %392 = vdwg.mxu0
  %v393 = vld [vmem:[%s3] sm:$0xf]
  %v394 = vld [vmem:[%s3 + $0x4] sm:$0xf]
  %v395 = vunpack.c.l.bf16 %v393
  %v396 = vunpack.c.l.bf16 %v394
  %v397 = vadd.f32 %v387, %v395
  %v398 = vadd.f32 %v390, %v396
  %399 = vadd.xlane.f32.xlu0 %v397
  %v400 = vpop.xlane.xlu0 %399
  %401 = vadd.xlane.f32.xlu0 %v398
  %v402 = vpop.xlane.xlu0 %401
  %v403 = vrcp.pop 128.0
  %v404 = vmul.f32 %v400, %v403
  %v405 = vmul.f32 %v402, %v403
  %v406 = vsub.f32 %v397, %v404
  %v407 = vsub.f32 %v398, %v405
  %v408 = vmul.f32 %v406, %v406
  %v409 = vmul.f32 %v407, %v407
  %410 = vadd.xlane.f32.xlu0 %v408
  %v411 = vpop.xlane.xlu0 %410
  %412 = vadd.xlane.f32.xlu0 %v409
  %v413 = vpop.xlane.xlu0 %412
  %v414 = vmul.f32 %v411, %v403
  %v415 = vmul.f32 %v413, %v403
  %v416 = vadd.f32 %v414, 1e-12
  %v417 = vadd.f32 %v415, 1e-12
  %v418 = vrsqrt.pop %v416
  %v419 = vrsqrt.pop %v417
  %v420 = vmul.f32 %v406, %v418
  %v421 = vmul.f32 %v407, %v419
  %v422 = vld [vmem:[%s4] sm:$0x1]
  %v424 = vlaneseq
  %v425 = vshrl.u32 %v424, 7
  %v426 = vsub.s32 0, %v425
  %v427 = vrot.slane %v422, %v426
  %v429 = vmul.f32 %v420, %v427
  %v430 = vmul.f32 %v421, %v427
  %v431 = vld [vmem:[%s5] sm:$0x1]
  %v433 = vlaneseq
  %v434 = vshrl.u32 %v433, 7
  %v435 = vsub.s32 0, %v434
  %v436 = vrot.slane %v431, %v435
  %v438 = vadd.f32 %v429, %v436
  %v439 = vadd.f32 %v430, %v436
  %v440 = vpack.c.bf16 %v439, %v438
  %v442 = vunpack.c.l.b16 %v440
  %v443 = vunpack.c.h.b16 %v440
  %v444 = vpack.c.b16 %v442, %v442
  %v445 = vpack.c.b16 %v443, %v443
  %448 = vst [vmem:[%s6] sm:$0xf] %v444
  %449 = vst [vmem:[%s6 + $0x4] sm:$0xf] %v445
  // Predicated region
  $region26: #{kobert_classifier_forward.17} parent=0 // pred_check
    _
  $region27: #{kobert_classifier_forward.17} parent=0 // pred_check_branch
    %451 = sbr.rel (0) target = $region29
  $region28: #{kobert_classifier_forward.17} parent=0 // pred_region
    _
  $region29: #{kobert_classifier_forward.17} parent=0 // pred_fallthru
    _
  // Predicated region
  $region30: #{kobert_classifier_forward.17} parent=0 // pred_check
    _
  $region31: #{kobert_classifier_forward.17} parent=0 // pred_check_branch
    %453 = sbr.rel (0) target = $region33
  $region32: #{kobert_classifier_forward.17} parent=0 // pred_region
    _
  $region33: #{kobert_classifier_forward.17} parent=0 // pred_fallthru
    _

</llo_original>
